<compile_context>
chip_gen: v7x
topology: tpu7x:2x2x1
jax: 0.10.0
libtpu: 0.0.40
codegen_flags: <defaults>
</compile_context>

<pallas_src>
import functools
import math

import jax
import jax.numpy as jnp
from jax import lax
from jax.experimental import pallas as pl
from jax.experimental.pallas import tpu as pltpu


def _vmem_limit_bytes():
    """~75% of this chip's per-core VMEM (v5e/v6e: 128 MiB, v7x: 64 MiB)."""
    cap = 64 * 1024 * 1024            # conservative fallback
    try:
        cap = pltpu.get_tpu_info().vmem_capacity_bytes
    except Exception:                 # non-TPU / older runtime: keep fallback
        pass
    return max(32 * 1024 * 1024, min(int(cap * 3 // 4), 96 * 1024 * 1024))


# ---------------------------------------------------------------------------
# Kernel 1: per-batch fused full-width QKV projection + all-heads attention.
# ---------------------------------------------------------------------------
def _mha_attention_kernel(q_ref, k_ref, v_ref, wq_ref, wk_ref, wv_ref, o_ref,
                          *, n_heads, scale):
    q = q_ref[0]                      # (Sq, Dq)
    k = k_ref[0]                      # (Sk, Dk)
    v = v_ref[0]                      # (Sk, Dv)

    # Full-width projections: N = n_hidden fills the MXU columns and is issued
    # once per batch (H x fewer MXU passes than per-head projections).
    Q = jnp.dot(q, wq_ref[...], preferred_element_type=jnp.float32)   # (Sq, Hd)
    K = jnp.dot(k, wk_ref[...], preferred_element_type=jnp.float32)   # (Sk, Hd)
    V = jnp.dot(v, wv_ref[...], preferred_element_type=jnp.float32)   # (Sk, Hd)

    sq = Q.shape[0]
    d = Q.shape[1] // n_heads

    for h in range(n_heads):          # static unroll; n_heads is small
        lo = h * d
        Qh = Q[:, lo:lo + d]          # free static slices of resident values
        Kh = K[:, lo:lo + d]
        Vh = V[:, lo:lo + d]

        # Q @ K^T without materialising K^T: MXU contracts K's last dim
        # natively, keeping the XLU slot free.
        s = lax.dot_general(Qh, Kh, (((1,), (1,)), ((), ())),
                            preferred_element_type=jnp.float32) * scale
        # Numerically stable softmax (f32 stats).
        m = jnp.max(s, axis=-1, keepdims=True)
        p = jnp.exp(s - m)
        l = jnp.sum(p, axis=-1, keepdims=True)
        o_h = jnp.dot(p, Vh, preferred_element_type=jnp.float32)      # (Sq, d)
        # Divide -> EUP approximate reciprocal + VPU multiply.
        o_h = o_h * pl.reciprocal(l, approx=True)

        # Rows emitted in (head, query) order == the module's contiguous
        # (H, Sq, d) buffer before its no-permute reshape.
        o_ref[0, h * sq:(h + 1) * sq, :] = o_h.astype(o_ref.dtype)


# ---------------------------------------------------------------------------
# Kernel 2: output projection  out = X @ W_o + b_o  (row-tiled matmul).
# ---------------------------------------------------------------------------
def _out_proj_kernel(x_ref, w_ref, b_ref, o_ref):
    acc = jnp.dot(x_ref[...], w_ref[...], preferred_element_type=jnp.float32)
    o_ref[...] = (acc + b_ref[...]).astype(o_ref.dtype)


def multi_head_attention(queries, keys, values, w_q, w_k, w_v, w_o, b_o,
                         *, n_heads, mask=None):
    """queries/keys/values: (B, S, D_in); returns (B, Sq, n_out)."""
    assert mask is None  # TODO(synk): mask support not implemented.
    B, Sq, Dq = queries.shape
    _, Sk, Dk = keys.shape
    _, _, Dv = values.shape
    n_hidden = w_q.shape[1]
    n_out = w_o.shape[1]
    assert n_hidden % n_heads == 0
    d_head = n_hidden // n_heads
    scale = 1.0 / math.sqrt(d_head)
    itemsize = queries.dtype.itemsize
    vmem_limit = _vmem_limit_bytes()

    attn_cost = pl.CostEstimate(
        flops=(2 * B * (Sq * Dq + Sk * Dk + Sk * Dv) * n_hidden
               + 4 * B * Sq * Sk * n_hidden),
        transcendentals=B * n_heads * Sq * (Sk + 1),
        bytes_accessed=(queries.size + keys.size + values.size
                        + w_q.size + w_k.size + w_v.size
                        + B * n_heads * Sq * d_head) * itemsize,
    )

    # grid=(B,) "parallel": with B >= 2 both v7x TensorCores are used.
    attn = pl.pallas_call(
        functools.partial(_mha_attention_kernel, n_heads=n_heads, scale=scale),
        out_shape=jax.ShapeDtypeStruct((B, n_heads * Sq, d_head), queries.dtype),
        grid=(B,),
        in_specs=[
            pl.BlockSpec((1, Sq, Dq), lambda b: (b, 0, 0)),
            pl.BlockSpec((1, Sk, Dk), lambda b: (b, 0, 0)),
            pl.BlockSpec((1, Sk, Dv), lambda b: (b, 0, 0)),
            # Full-width weights: constant block index -> DMA'd once, resident.
            pl.BlockSpec((Dq, n_hidden), lambda b: (0, 0)),
            pl.BlockSpec((Dk, n_hidden), lambda b: (0, 0)),
            pl.BlockSpec((Dv, n_hidden), lambda b: (0, 0)),
        ],
        out_specs=pl.BlockSpec((1, n_heads * Sq, d_head), lambda b: (b, 0, 0)),
        compiler_params=pltpu.CompilerParams(
            dimension_semantics=("parallel",),
            vmem_limit_bytes=vmem_limit,
        ),
        cost_estimate=attn_cost,
    )(queries, keys, values, w_q, w_k, w_v)

    # Module-faithful concat: out.reshape(B, Sq, -1) on the contiguous
    # (B, H, Sq, d) buffer with NO permute.  The kernel already produced rows
    # in (H, Sq) order, so this is a free row-major reinterpretation.
    ctx = attn.reshape(B * Sq, n_hidden)

    # Output projection with bias (W_o = LazyLinear(n_out) => bias=True).
    M = B * Sq
    tm = M if M <= 512 else 512
    proj_cost = pl.CostEstimate(
        flops=2 * M * n_hidden * n_out,
        transcendentals=0,
        bytes_accessed=(M * n_hidden + n_hidden * n_out + n_out
                        + M * n_out) * itemsize,
    )
    out = pl.pallas_call(
        _out_proj_kernel,
        out_shape=jax.ShapeDtypeStruct((M, n_out), queries.dtype),
        grid=(pl.cdiv(M, tm),),
        in_specs=[
            pl.BlockSpec((tm, n_hidden), lambda i: (i, 0)),
            pl.BlockSpec((n_hidden, n_out), lambda i: (0, 0)),
            pl.BlockSpec((1, n_out), lambda i: (0, 0)),
        ],
        out_specs=pl.BlockSpec((tm, n_out), lambda i: (i, 0)),
        compiler_params=pltpu.CompilerParams(
            dimension_semantics=("parallel",),
            vmem_limit_bytes=vmem_limit,
        ),
        cost_estimate=proj_cost,
    )(ctx, w_o, b_o.reshape(1, n_out))

    return out.reshape(B, Sq, n_out)


def _reference(queries, keys, values, w_q, w_k, w_v, w_o, b_o, n_heads):
    """Pure-JAX reference matching the PyTorch forward (mask=None)."""
    B, Sq, _ = queries.shape
    n_hidden = w_q.shape[1]
    d = n_hidden // n_heads

    def split(x):  # transpose_QKV
        return x.reshape(x.shape[0], x.shape[1], n_heads, d).transpose(0, 2, 1, 3)

    Q = split(queries @ w_q)
    K = split(keys @ w_k)
    V = split(values @ w_v)
    s = jnp.einsum("bhqd,bhkd->bhqk", Q, K) / math.sqrt(d)
    p = jax.nn.softmax(s, axis=-1)
    o = jnp.einsum("bhqk,bhkd->bhqd", p, V)          # (B, H, Sq, d)
    o = o.reshape(B, Sq, n_hidden)                   # same no-permute reshape
    return o @ w_o + b_o


if __name__ == "__main__":
    B, Sq, Sk = 2, 8, 8
    d_model, n_heads, n_hidden, n_out = 32, 4, 32, 32

    key = jax.random.PRNGKey(0)
    kq, kk, kv, k1, k2, k3, k4, k5 = jax.random.split(key, 8)
    queries = jax.random.normal(kq, (B, Sq, d_model), dtype=jnp.float32)
    keys = jax.random.normal(kk, (B, Sk, d_model), dtype=jnp.float32)
    values = jax.random.normal(kv, (B, Sk, d_model), dtype=jnp.float32)
    w_q = jax.random.normal(k1, (d_model, n_hidden), jnp.float32) / math.sqrt(d_model)
    w_k = jax.random.normal(k2, (d_model, n_hidden), jnp.float32) / math.sqrt(d_model)
    w_v = jax.random.normal(k3, (d_model, n_hidden), jnp.float32) / math.sqrt(d_model)
    w_o = jax.random.normal(k4, (n_hidden, n_out), jnp.float32) / math.sqrt(n_hidden)
    b_o = jax.random.normal(k5, (n_out,), jnp.float32)

    out = multi_head_attention(queries, keys, values, w_q, w_k, w_v, w_o, b_o,
                               n_heads=n_heads)
    jax.block_until_ready(out)
    assert out.shape == (B, Sq, n_out) and out.dtype == queries.dtype

    ref = _reference(queries, keys, values, w_q, w_k, w_v, w_o, b_o, n_heads)
    # Tolerance accounts for the EUP approximate reciprocal (~2^-12 relative)
    # used for the softmax denominator.
    assert jnp.allclose(out, ref, atol=5e-3, rtol=5e-3), float(
        jnp.max(jnp.abs(out - ref)))

    print("KERNEL_OK")
</pallas_src>

<mosaic_0001>
module attributes {stable_mosaic.version = 11 : i64} {
  func.func @_mha_attention_kernel(%arg0: i32, %arg1: memref<1x8x32xf32, #tpu.memory_space<vmem>>, %arg2: memref<1x8x32xf32, #tpu.memory_space<vmem>>, %arg3: memref<1x8x32xf32, #tpu.memory_space<vmem>>, %arg4: memref<32x32xf32, #tpu.memory_space<vmem>>, %arg5: memref<32x32xf32, #tpu.memory_space<vmem>>, %arg6: memref<32x32xf32, #tpu.memory_space<vmem>>, %arg7: memref<1x32x8xf32, #tpu.memory_space<vmem>>) attributes {dimension_semantics = [#tpu.dimension_semantics<parallel>], iteration_bounds = array<i64: 2>, scalar_prefetch = 0 : i64, scratch_operands = 0 : i64, tpu.core_type = #tpu.core_type<tc>, window_params = [{transform_indices = @transform_0, window_bounds = array<i64: 1, 8, 32>}, {transform_indices = @transform_1, window_bounds = array<i64: 1, 8, 32>}, {transform_indices = @transform_2, window_bounds = array<i64: 1, 8, 32>}, {pipeline_mode = #tpu.pipeline_mode<synchronous>, transform_indices = @transform_3, window_bounds = array<i64: 32, 32>}, {pipeline_mode = #tpu.pipeline_mode<synchronous>, transform_indices = @transform_4, window_bounds = array<i64: 32, 32>}, {pipeline_mode = #tpu.pipeline_mode<synchronous>, transform_indices = @transform_5, window_bounds = array<i64: 32, 32>}, {transform_indices = @transform_6, window_bounds = array<i64: 1, 32, 8>}]} {
    %c0 = arith.constant 0 : index
    %c0_0 = arith.constant 0 : index
    %c0_1 = arith.constant 0 : index
    %0 = vector.load %arg1[%c0, %c0_0, %c0_1] : memref<1x8x32xf32, #tpu.memory_space<vmem>>, vector<1x8x32xf32>
    %1 = vector.shape_cast %0 : vector<1x8x32xf32> to vector<8x32xf32>
    %c0_2 = arith.constant 0 : index
    %c0_3 = arith.constant 0 : index
    %c0_4 = arith.constant 0 : index
    %2 = vector.load %arg2[%c0_2, %c0_3, %c0_4] : memref<1x8x32xf32, #tpu.memory_space<vmem>>, vector<1x8x32xf32>
    %3 = vector.shape_cast %2 : vector<1x8x32xf32> to vector<8x32xf32>
    %c0_5 = arith.constant 0 : index
    %c0_6 = arith.constant 0 : index
    %c0_7 = arith.constant 0 : index
    %4 = vector.load %arg3[%c0_5, %c0_6, %c0_7] : memref<1x8x32xf32, #tpu.memory_space<vmem>>, vector<1x8x32xf32>
    %5 = vector.shape_cast %4 : vector<1x8x32xf32> to vector<8x32xf32>
    %c0_8 = arith.constant 0 : index
    %c0_9 = arith.constant 0 : index
    %6 = vector.load %arg4[%c0_8, %c0_9] : memref<32x32xf32, #tpu.memory_space<vmem>>, vector<32x32xf32>
    %cst = arith.constant dense<0.000000e+00> : vector<8x32xf32>
    %7 = tpu.matmul %1, %6, %cst {dimension_numbers = #tpu.dot_dimension_numbers<[1], [0], [0], [1], [0, 0, 1, 1], [], []>} : vector<8x32xf32>, vector<32x32xf32>, vector<8x32xf32> -> vector<8x32xf32>
    %c0_10 = arith.constant 0 : index
    %c0_11 = arith.constant 0 : index
    %8 = vector.load %arg5[%c0_10, %c0_11] : memref<32x32xf32, #tpu.memory_space<vmem>>, vector<32x32xf32>
    %cst_12 = arith.constant dense<0.000000e+00> : vector<8x32xf32>
    %9 = tpu.matmul %3, %8, %cst_12 {dimension_numbers = #tpu.dot_dimension_numbers<[1], [0], [0], [1], [0, 0, 1, 1], [], []>} : vector<8x32xf32>, vector<32x32xf32>, vector<8x32xf32> -> vector<8x32xf32>
    %c0_13 = arith.constant 0 : index
    %c0_14 = arith.constant 0 : index
    %10 = vector.load %arg6[%c0_13, %c0_14] : memref<32x32xf32, #tpu.memory_space<vmem>>, vector<32x32xf32>
    %cst_15 = arith.constant dense<0.000000e+00> : vector<8x32xf32>
    %11 = tpu.matmul %5, %10, %cst_15 {dimension_numbers = #tpu.dot_dimension_numbers<[1], [0], [0], [1], [0, 0, 1, 1], [], []>} : vector<8x32xf32>, vector<32x32xf32>, vector<8x32xf32> -> vector<8x32xf32>
    %12 = vector.extract_strided_slice %7 {offsets = [0, 0], sizes = [8, 8], strides = [1, 1]} : vector<8x32xf32> to vector<8x8xf32>
    %13 = vector.extract_strided_slice %9 {offsets = [0, 0], sizes = [8, 8], strides = [1, 1]} : vector<8x32xf32> to vector<8x8xf32>
    %14 = vector.extract_strided_slice %11 {offsets = [0, 0], sizes = [8, 8], strides = [1, 1]} : vector<8x32xf32> to vector<8x8xf32>
    %cst_16 = arith.constant dense<0.000000e+00> : vector<8x8xf32>
    %15 = tpu.matmul %12, %13, %cst_16 {dimension_numbers = #tpu.dot_dimension_numbers<[1], [1], [0], [0], [0, 0, 1, 0], [], []>} : vector<8x8xf32>, vector<8x8xf32>, vector<8x8xf32> -> vector<8x8xf32>
    %cst_17 = arith.constant 0.353553385 : f32
    %16 = vector.broadcast %cst_17 : f32 to vector<8x8xf32>
    %17 = arith.mulf %15, %16 : vector<8x8xf32>
    %cst_18 = arith.constant dense<0xFF800000> : vector<8xf32>
    %18 = vector.multi_reduction <maximumf>, %17, %cst_18 [1] : vector<8x8xf32> to vector<8xf32>
    %19 = vector.shape_cast %18 : vector<8xf32> to vector<8x1xf32>
    %20 = vector.broadcast %19 : vector<8x1xf32> to vector<8x8xf32>
    %21 = arith.subf %17, %20 : vector<8x8xf32>
    %22 = math.exp %21 : vector<8x8xf32>
    %cst_19 = arith.constant dense<0.000000e+00> : vector<8xf32>
    %23 = vector.multi_reduction <add>, %22, %cst_19 [1] : vector<8x8xf32> to vector<8xf32>
    %24 = vector.shape_cast %23 : vector<8xf32> to vector<8x1xf32>
    %cst_20 = arith.constant dense<0.000000e+00> : vector<8x8xf32>
    %25 = tpu.matmul %22, %14, %cst_20 {dimension_numbers = #tpu.dot_dimension_numbers<[1], [0], [0], [1], [0, 0, 1, 1], [], []>} : vector<8x8xf32>, vector<8x8xf32>, vector<8x8xf32> -> vector<8x8xf32>
    %26 = tpu.reciprocal %24 {approx = true} : vector<8x1xf32> -> vector<8x1xf32>
    %27 = vector.broadcast %26 : vector<8x1xf32> to vector<8x8xf32>
    %28 = arith.mulf %25, %27 : vector<8x8xf32>
    %c0_21 = arith.constant 0 : index
    %c0_22 = arith.constant 0 : index
    %c0_23 = arith.constant 0 : index
    %29 = vector.load %arg7[%c0_21, %c0_22, %c0_23] : memref<1x32x8xf32, #tpu.memory_space<vmem>>, vector<1x8x8xf32>
    %30 = vector.shape_cast %29 : vector<1x8x8xf32> to vector<8x8xf32>
    %31 = vector.shape_cast %28 : vector<8x8xf32> to vector<1x8x8xf32>
    tpu.vector_store %arg7[%c0_21, %c0_22, %c0_23], %31 {strides = array<i32>} : memref<1x32x8xf32, #tpu.memory_space<vmem>>, vector<1x8x8xf32>,
    %32 = vector.extract_strided_slice %7 {offsets = [0, 8], sizes = [8, 8], strides = [1, 1]} : vector<8x32xf32> to vector<8x8xf32>
    %33 = vector.extract_strided_slice %9 {offsets = [0, 8], sizes = [8, 8], strides = [1, 1]} : vector<8x32xf32> to vector<8x8xf32>
    %34 = vector.extract_strided_slice %11 {offsets = [0, 8], sizes = [8, 8], strides = [1, 1]} : vector<8x32xf32> to vector<8x8xf32>
    %cst_24 = arith.constant dense<0.000000e+00> : vector<8x8xf32>
    %35 = tpu.matmul %32, %33, %cst_24 {dimension_numbers = #tpu.dot_dimension_numbers<[1], [1], [0], [0], [0, 0, 1, 0], [], []>} : vector<8x8xf32>, vector<8x8xf32>, vector<8x8xf32> -> vector<8x8xf32>
    %cst_25 = arith.constant 0.353553385 : f32
    %36 = vector.broadcast %cst_25 : f32 to vector<8x8xf32>
    %37 = arith.mulf %35, %36 : vector<8x8xf32>
    %cst_26 = arith.constant dense<0xFF800000> : vector<8xf32>
    %38 = vector.multi_reduction <maximumf>, %37, %cst_26 [1] : vector<8x8xf32> to vector<8xf32>
    %39 = vector.shape_cast %38 : vector<8xf32> to vector<8x1xf32>
    %40 = vector.broadcast %39 : vector<8x1xf32> to vector<8x8xf32>
    %41 = arith.subf %37, %40 : vector<8x8xf32>
    %42 = math.exp %41 : vector<8x8xf32>
    %cst_27 = arith.constant dense<0.000000e+00> : vector<8xf32>
    %43 = vector.multi_reduction <add>, %42, %cst_27 [1] : vector<8x8xf32> to vector<8xf32>
    %44 = vector.shape_cast %43 : vector<8xf32> to vector<8x1xf32>
    %cst_28 = arith.constant dense<0.000000e+00> : vector<8x8xf32>
    %45 = tpu.matmul %42, %34, %cst_28 {dimension_numbers = #tpu.dot_dimension_numbers<[1], [0], [0], [1], [0, 0, 1, 1], [], []>} : vector<8x8xf32>, vector<8x8xf32>, vector<8x8xf32> -> vector<8x8xf32>
    %46 = tpu.reciprocal %44 {approx = true} : vector<8x1xf32> -> vector<8x1xf32>
    %47 = vector.broadcast %46 : vector<8x1xf32> to vector<8x8xf32>
    %48 = arith.mulf %45, %47 : vector<8x8xf32>
    %c0_29 = arith.constant 0 : index
    %c8 = arith.constant 8 : index
    %c0_30 = arith.constant 0 : index
    %49 = vector.load %arg7[%c0_29, %c8, %c0_30] : memref<1x32x8xf32, #tpu.memory_space<vmem>>, vector<1x8x8xf32>
    %50 = vector.shape_cast %49 : vector<1x8x8xf32> to vector<8x8xf32>
    %51 = vector.shape_cast %48 : vector<8x8xf32> to vector<1x8x8xf32>
    tpu.vector_store %arg7[%c0_29, %c8, %c0_30], %51 {strides = array<i32>} : memref<1x32x8xf32, #tpu.memory_space<vmem>>, vector<1x8x8xf32>,
    %52 = vector.extract_strided_slice %7 {offsets = [0, 16], sizes = [8, 8], strides = [1, 1]} : vector<8x32xf32> to vector<8x8xf32>
    %53 = vector.extract_strided_slice %9 {offsets = [0, 16], sizes = [8, 8], strides = [1, 1]} : vector<8x32xf32> to vector<8x8xf32>
    %54 = vector.extract_strided_slice %11 {offsets = [0, 16], sizes = [8, 8], strides = [1, 1]} : vector<8x32xf32> to vector<8x8xf32>
    %cst_31 = arith.constant dense<0.000000e+00> : vector<8x8xf32>
    %55 = tpu.matmul %52, %53, %cst_31 {dimension_numbers = #tpu.dot_dimension_numbers<[1], [1], [0], [0], [0, 0, 1, 0], [], []>} : vector<8x8xf32>, vector<8x8xf32>, vector<8x8xf32> -> vector<8x8xf32>
    %cst_32 = arith.constant 0.353553385 : f32
    %56 = vector.broadcast %cst_32 : f32 to vector<8x8xf32>
    %57 = arith.mulf %55, %56 : vector<8x8xf32>
    %cst_33 = arith.constant dense<0xFF800000> : vector<8xf32>
    %58 = vector.multi_reduction <maximumf>, %57, %cst_33 [1] : vector<8x8xf32> to vector<8xf32>
    %59 = vector.shape_cast %58 : vector<8xf32> to vector<8x1xf32>
    %60 = vector.broadcast %59 : vector<8x1xf32> to vector<8x8xf32>
    %61 = arith.subf %57, %60 : vector<8x8xf32>
    %62 = math.exp %61 : vector<8x8xf32>
    %cst_34 = arith.constant dense<0.000000e+00> : vector<8xf32>
    %63 = vector.multi_reduction <add>, %62, %cst_34 [1] : vector<8x8xf32> to vector<8xf32>
    %64 = vector.shape_cast %63 : vector<8xf32> to vector<8x1xf32>
    %cst_35 = arith.constant dense<0.000000e+00> : vector<8x8xf32>
    %65 = tpu.matmul %62, %54, %cst_35 {dimension_numbers = #tpu.dot_dimension_numbers<[1], [0], [0], [1], [0, 0, 1, 1], [], []>} : vector<8x8xf32>, vector<8x8xf32>, vector<8x8xf32> -> vector<8x8xf32>
    %66 = tpu.reciprocal %64 {approx = true} : vector<8x1xf32> -> vector<8x1xf32>
    %67 = vector.broadcast %66 : vector<8x1xf32> to vector<8x8xf32>
    %68 = arith.mulf %65, %67 : vector<8x8xf32>
    %c0_36 = arith.constant 0 : index
    %c16 = arith.constant 16 : index
    %c0_37 = arith.constant 0 : index
    %69 = vector.load %arg7[%c0_36, %c16, %c0_37] : memref<1x32x8xf32, #tpu.memory_space<vmem>>, vector<1x8x8xf32>
    %70 = vector.shape_cast %69 : vector<1x8x8xf32> to vector<8x8xf32>
    %71 = vector.shape_cast %68 : vector<8x8xf32> to vector<1x8x8xf32>
    tpu.vector_store %arg7[%c0_36, %c16, %c0_37], %71 {strides = array<i32>} : memref<1x32x8xf32, #tpu.memory_space<vmem>>, vector<1x8x8xf32>,
    %72 = vector.extract_strided_slice %7 {offsets = [0, 24], sizes = [8, 8], strides = [1, 1]} : vector<8x32xf32> to vector<8x8xf32>
    %73 = vector.extract_strided_slice %9 {offsets = [0, 24], sizes = [8, 8], strides = [1, 1]} : vector<8x32xf32> to vector<8x8xf32>
    %74 = vector.extract_strided_slice %11 {offsets = [0, 24], sizes = [8, 8], strides = [1, 1]} : vector<8x32xf32> to vector<8x8xf32>
    %cst_38 = arith.constant dense<0.000000e+00> : vector<8x8xf32>
    %75 = tpu.matmul %72, %73, %cst_38 {dimension_numbers = #tpu.dot_dimension_numbers<[1], [1], [0], [0], [0, 0, 1, 0], [], []>} : vector<8x8xf32>, vector<8x8xf32>, vector<8x8xf32> -> vector<8x8xf32>
    %cst_39 = arith.constant 0.353553385 : f32
    %76 = vector.broadcast %cst_39 : f32 to vector<8x8xf32>
    %77 = arith.mulf %75, %76 : vector<8x8xf32>
    %cst_40 = arith.constant dense<0xFF800000> : vector<8xf32>
    %78 = vector.multi_reduction <maximumf>, %77, %cst_40 [1] : vector<8x8xf32> to vector<8xf32>
    %79 = vector.shape_cast %78 : vector<8xf32> to vector<8x1xf32>
    %80 = vector.broadcast %79 : vector<8x1xf32> to vector<8x8xf32>
    %81 = arith.subf %77, %80 : vector<8x8xf32>
    %82 = math.exp %81 : vector<8x8xf32>
    %cst_41 = arith.constant dense<0.000000e+00> : vector<8xf32>
    %83 = vector.multi_reduction <add>, %82, %cst_41 [1] : vector<8x8xf32> to vector<8xf32>
    %84 = vector.shape_cast %83 : vector<8xf32> to vector<8x1xf32>
    %cst_42 = arith.constant dense<0.000000e+00> : vector<8x8xf32>
    %85 = tpu.matmul %82, %74, %cst_42 {dimension_numbers = #tpu.dot_dimension_numbers<[1], [0], [0], [1], [0, 0, 1, 1], [], []>} : vector<8x8xf32>, vector<8x8xf32>, vector<8x8xf32> -> vector<8x8xf32>
    %86 = tpu.reciprocal %84 {approx = true} : vector<8x1xf32> -> vector<8x1xf32>
    %87 = vector.broadcast %86 : vector<8x1xf32> to vector<8x8xf32>
    %88 = arith.mulf %85, %87 : vector<8x8xf32>
    %c0_43 = arith.constant 0 : index
    %c24 = arith.constant 24 : index
    %c0_44 = arith.constant 0 : index
    %89 = vector.load %arg7[%c0_43, %c24, %c0_44] : memref<1x32x8xf32, #tpu.memory_space<vmem>>, vector<1x8x8xf32>
    %90 = vector.shape_cast %89 : vector<1x8x8xf32> to vector<8x8xf32>
    %91 = vector.shape_cast %88 : vector<8x8xf32> to vector<1x8x8xf32>
    tpu.vector_store %arg7[%c0_43, %c24, %c0_44], %91 {strides = array<i32>} : memref<1x32x8xf32, #tpu.memory_space<vmem>>, vector<1x8x8xf32>,
    return
  }
  func.func @transform_0(%arg0: i32) -> (i32, i32, i32) {
    %c0_i32 = arith.constant 0 : i32
    %c0_i32_0 = arith.constant 0 : i32
    %c0_i32_1 = arith.constant 0 : i32
    return %arg0, %c0_i32, %c0_i32_0 : i32, i32, i32
  }
  func.func @transform_1(%arg0: i32) -> (i32, i32, i32) {
    %c0_i32 = arith.constant 0 : i32
    %c0_i32_0 = arith.constant 0 : i32
    %c0_i32_1 = arith.constant 0 : i32
    return %arg0, %c0_i32, %c0_i32_0 : i32, i32, i32
  }
  func.func @transform_2(%arg0: i32) -> (i32, i32, i32) {
    %c0_i32 = arith.constant 0 : i32
    %c0_i32_0 = arith.constant 0 : i32
    %c0_i32_1 = arith.constant 0 : i32
    return %arg0, %c0_i32, %c0_i32_0 : i32, i32, i32
  }
  func.func @transform_3(%arg0: i32) -> (i32, i32) {
    %c0_i32 = arith.constant 0 : i32
    %c0_i32_0 = arith.constant 0 : i32
    %c0_i32_1 = arith.constant 0 : i32
    return %c0_i32, %c0_i32_0 : i32, i32
  }
  func.func @transform_4(%arg0: i32) -> (i32, i32) {
    %c0_i32 = arith.constant 0 : i32
    %c0_i32_0 = arith.constant 0 : i32
    %c0_i32_1 = arith.constant 0 : i32
    return %c0_i32, %c0_i32_0 : i32, i32
  }
  func.func @transform_5(%arg0: i32) -> (i32, i32) {
    %c0_i32 = arith.constant 0 : i32
    %c0_i32_0 = arith.constant 0 : i32
    %c0_i32_1 = arith.constant 0 : i32
    return %c0_i32, %c0_i32_0 : i32, i32
  }
  func.func @transform_6(%arg0: i32) -> (i32, i32, i32) {
    %c0_i32 = arith.constant 0 : i32
    %c0_i32_0 = arith.constant 0 : i32
    %c0_i32_1 = arith.constant 0 : i32
    return %arg0, %c0_i32, %c0_i32_0 : i32, i32, i32
  }
}

</mosaic_0001>

<llo_original>
// kernel: tpu_custom_call.1
$region0: #{tpu_custom_call.1}
  #allocation0 [shape = 'u32[]', space=smem, size = 0x4, offset = 0x4, fixed_abs, tag = 'smem constant byte address 0x4 - core index']
  #allocation1 [shape = 'u32[144,128]{1,0:T(1,128)}', space=vmem, size = 0x12000, scoped, tag = 'internal scratch']
  %s0 = inlined_call_operand.hbm [shape: f32[2,8,32], index: 0, kind: input, shape index: {}]
  %s1 = inlined_call_operand.hbm [shape: f32[2,8,32], index: 1, kind: input, shape index: {}]
  %s2 = inlined_call_operand.hbm [shape: f32[2,8,32], index: 2, kind: input, shape index: {}]
  %s3 = inlined_call_operand.hbm [shape: f32[32,32], index: 3, kind: input, shape index: {}]
  %s4 = inlined_call_operand.hbm [shape: f32[32,32], index: 4, kind: input, shape index: {}]
  %s5 = inlined_call_operand.hbm [shape: f32[32,32], index: 5, kind: input, shape index: {}]
  %s6 = inlined_call_operand.vmem [shape: f32[2,32,8], index: 6, kind: output, shape index: {}]
  %s7 = sld [smem:[#allocation0]]
  $region81: #{tpu_custom_call.1} parent=0
    _
  %s9 = ssub.s32 1, %s7
  %s10 = scalar_select 0, %s9, %s7
  $region1: #{tpu_custom_call.1} parent=0
    #allocation2 [shape = 'u8[8192]{0}', space=vmem, size = 0x2000, scoped, tag = 'input window, operand 0']
    #allocation3 [shape = 's32[2]{0}', space=sflag, size = 0x8, scoped, tag = 'scoped memory for tpu_custom_call.1']
    #allocation4 [shape = 'u8[8192]{0}', space=vmem, size = 0x2000, scoped, tag = 'input window, operand 1']
    #allocation5 [shape = 's32[2]{0}', space=sflag, size = 0x8, scoped, tag = 'scoped memory for tpu_custom_call.1']
    #allocation6 [shape = 'u8[8192]{0}', space=vmem, size = 0x2000, scoped, tag = 'input window, operand 2']
    #allocation7 [shape = 'u8[16384]{0}', space=vmem, size = 0x4000, scoped, tag = 'input window, operand 3, single buffered']
    #allocation8 [shape = 's32[1]{0}', space=sflag, size = 0x4, scoped, tag = 'scoped memory for tpu_custom_call.1']
    #allocation9 [shape = 'u8[16384]{0}', space=vmem, size = 0x4000, scoped, tag = 'input window, operand 4, single buffered']
    #allocation10 [shape = 'u8[16384]{0}', space=vmem, size = 0x4000, scoped, tag = 'input window, operand 5, single buffered']
    #allocation11 [shape = 's32[1]{0}', space=sflag, size = 0x4, scoped, tag = 'scoped memory for tpu_custom_call.1']
    %11 = vsyncpa [#allocation3], 0
    %s12 = scalar_lea.sflag [#allocation3], 1
    %13 = vsyncpa %s12, 0
    %14 = vsyncpa [#allocation5], 0
    %s15 = scalar_lea.sflag [#allocation5], 1
    %16 = vsyncpa %s15, 0
    %17 = vsyncpa [#allocation8], 0
    %18 = vsyncpa [#allocation11], 0
    loop: start=0, step=1, limit=4
    $region2: #{tpu_custom_call.1} parent=1 // loop_pre_header
      _
    $region3: #{tpu_custom_call.1} parent=1 // loop_header
      %s20 = sphi 0, %s24
      %p21 = scmp.ge.s32.totalorder %s20, 4
      %s30 = sphi 0, %s32
      %s33 = sphi 0, %s30
      %s34 = sphi 0, %s33
      %s50 = sphi 0, %s34
      %s56 = sphi 0, %s58
      %s59 = sphi 0, %s56
      %s60 = sphi 0, %s59
      %s76 = sphi 0, %s60
      %s82 = sphi 0, %s84
      %s85 = sphi 0, %s82
      %s86 = sphi 0, %s85
      %s102 = sphi 0, %s86
      %s106 = sphi 0, %s106
      %s108 = sphi 0, %s106
      %s109 = sphi 0, %s108
      %s123 = sphi 0, %s109
      %s127 = sphi 0, %s127
      %s129 = sphi 0, %s127
      %s130 = sphi 0, %s129
      %s144 = sphi 0, %s130
      %s148 = sphi 0, %s148
      %s150 = sphi 0, %s148
      %s151 = sphi 0, %s150
      %s165 = sphi 0, %s151
      %s171 = sphi 0, %s173
      %s174 = sphi 0, %s171
      %s175 = sphi 0, %s174
      %s191 = sphi 0, %s175
    $region4: #{tpu_custom_call.1} parent=1 // loop_header_branch
      %23 = sbr.rel (%p21) target = $region8
    $region5: #{tpu_custom_call.1} parent=1 // loop_body
      %s25 = ssub.s32 %s20, 1
      %s26 = ssub.s32 %s20, 2
      %s27 = sadd.s32 %s20, 1
      %s28 = ssub.s32 %s20, %s27
      %p29 = scmp.eq.s32.totalorder %s28, 0
      %s31 = sadd.s32 %s30, 1
      %s32 = scalar_select %p29, %s30, %s31
      %p35 = pneg %p29
      %p36 = scmp.eq.s32.totalorder %s20, 1
      %p37 = por %p35, %p36
      %p38 = scmp.ne.s32.totalorder %s30, %s33
      %p39 = scmp.eq.s32.totalorder %s20, 0
      %p40 = por %p38, %p39
      %p41 = scmp.ne.s32.totalorder %s30, %s33
      %p42 = scmp.eq.s32.totalorder %s25, 1
      %p43 = por %p41, %p42
      %p44 = scmp.ne.s32.totalorder %s33, %s34
      %p45 = scmp.eq.s32.totalorder %s25, 0
      %p46 = por %p44, %p45
      %p47 = scmp.ne.s32.totalorder %s33, %s34
      %p48 = scmp.eq.s32.totalorder %s26, 1
      %p49 = por %p47, %p48
      %p51 = scmp.ne.s32.totalorder %s34, %s50
      %p52 = scmp.eq.s32.totalorder %s26, 0
      %p53 = por %p51, %p52
      %s54 = ssub.s32 %s20, %s27
      %p55 = scmp.eq.s32.totalorder %s54, 0
      %s57 = sadd.s32 %s56, 1
      %s58 = scalar_select %p55, %s56, %s57
      %p61 = pneg %p55
      %p62 = scmp.eq.s32.totalorder %s20, 1
      %p63 = por %p61, %p62
      %p64 = scmp.ne.s32.totalorder %s56, %s59
      %p65 = scmp.eq.s32.totalorder %s20, 0
      %p66 = por %p64, %p65
      %p67 = scmp.ne.s32.totalorder %s56, %s59
      %p68 = scmp.eq.s32.totalorder %s25, 1
      %p69 = por %p67, %p68
      %p70 = scmp.ne.s32.totalorder %s59, %s60
      %p71 = scmp.eq.s32.totalorder %s25, 0
      %p72 = por %p70, %p71
      %p73 = scmp.ne.s32.totalorder %s59, %s60
      %p74 = scmp.eq.s32.totalorder %s26, 1
      %p75 = por %p73, %p74
      %p77 = scmp.ne.s32.totalorder %s60, %s76
      %p78 = scmp.eq.s32.totalorder %s26, 0
      %p79 = por %p77, %p78
      %s80 = ssub.s32 %s20, %s27
      %p81 = scmp.eq.s32.totalorder %s80, 0
      %s83 = sadd.s32 %s82, 1
      %s84 = scalar_select %p81, %s82, %s83
      %p87 = pneg %p81
      %p88 = scmp.eq.s32.totalorder %s20, 1
      %p89 = por %p87, %p88
      %p90 = scmp.ne.s32.totalorder %s82, %s85
      %p91 = scmp.eq.s32.totalorder %s20, 0
      %p92 = por %p90, %p91
      %p93 = scmp.ne.s32.totalorder %s82, %s85
      %p94 = scmp.eq.s32.totalorder %s25, 1
      %p95 = por %p93, %p94
      %p96 = scmp.ne.s32.totalorder %s85, %s86
      %p97 = scmp.eq.s32.totalorder %s25, 0
      %p98 = por %p96, %p97
      %p99 = scmp.ne.s32.totalorder %s85, %s86
      %p100 = scmp.eq.s32.totalorder %s26, 1
      %p101 = por %p99, %p100
      %p103 = scmp.ne.s32.totalorder %s86, %s102
      %p104 = scmp.eq.s32.totalorder %s26, 0
      %p105 = por %p103, %p104
      %s107 = sadd.s32 %s106, 1
      %p110 = scmp.eq.s32.totalorder %s20, 1
      %p111 = scmp.ne.s32.totalorder %s106, %s108
      %p112 = scmp.eq.s32.totalorder %s20, 0
      %p113 = por %p111, %p112
      %p114 = scmp.ne.s32.totalorder %s106, %s108
      %p115 = scmp.eq.s32.totalorder %s25, 1
      %p116 = por %p114, %p115
      %p117 = scmp.ne.s32.totalorder %s108, %s109
      %p118 = scmp.eq.s32.totalorder %s25, 0
      %p119 = por %p117, %p118
      %p120 = scmp.ne.s32.totalorder %s108, %s109
      %p121 = scmp.eq.s32.totalorder %s26, 1
      %p122 = por %p120, %p121
      %p124 = scmp.ne.s32.totalorder %s109, %s123
      %p125 = scmp.eq.s32.totalorder %s26, 0
      %p126 = por %p124, %p125
      %s128 = sadd.s32 %s127, 1
      %p131 = scmp.eq.s32.totalorder %s20, 1
      %p132 = scmp.ne.s32.totalorder %s127, %s129
      %p133 = scmp.eq.s32.totalorder %s20, 0
      %p134 = por %p132, %p133
      %p135 = scmp.ne.s32.totalorder %s127, %s129
      %p136 = scmp.eq.s32.totalorder %s25, 1
      %p137 = por %p135, %p136
      %p138 = scmp.ne.s32.totalorder %s129, %s130
      %p139 = scmp.eq.s32.totalorder %s25, 0
      %p140 = por %p138, %p139
      %p141 = scmp.ne.s32.totalorder %s129, %s130
      %p142 = scmp.eq.s32.totalorder %s26, 1
      %p143 = por %p141, %p142
      %p145 = scmp.ne.s32.totalorder %s130, %s144
      %p146 = scmp.eq.s32.totalorder %s26, 0
      %p147 = por %p145, %p146
      %s149 = sadd.s32 %s148, 1
      %p152 = scmp.eq.s32.totalorder %s20, 1
      %p153 = scmp.ne.s32.totalorder %s148, %s150
      %p154 = scmp.eq.s32.totalorder %s20, 0
      %p155 = por %p153, %p154
      %p156 = scmp.ne.s32.totalorder %s148, %s150
      %p157 = scmp.eq.s32.totalorder %s25, 1
      %p158 = por %p156, %p157
      %p159 = scmp.ne.s32.totalorder %s150, %s151
      %p160 = scmp.eq.s32.totalorder %s25, 0
      %p161 = por %p159, %p160
      %p162 = scmp.ne.s32.totalorder %s150, %s151
      %p163 = scmp.eq.s32.totalorder %s26, 1
      %p164 = por %p162, %p163
      %p166 = scmp.ne.s32.totalorder %s151, %s165
      %p167 = scmp.eq.s32.totalorder %s26, 0
      %p168 = por %p166, %p167
      %s169 = ssub.s32 %s20, %s27
      %p170 = scmp.eq.s32.totalorder %s169, 0
      %s172 = sadd.s32 %s171, 1
      %s173 = scalar_select %p170, %s171, %s172
      %p176 = pneg %p170
      %p177 = scmp.eq.s32.totalorder %s20, 1
      %p178 = por %p176, %p177
      %p179 = scmp.ne.s32.totalorder %s171, %s174
      %p180 = scmp.eq.s32.totalorder %s20, 0
      %p181 = por %p179, %p180
      %p182 = scmp.ne.s32.totalorder %s171, %s174
      %p183 = scmp.eq.s32.totalorder %s25, 1
      %p184 = por %p182, %p183
      %p185 = scmp.ne.s32.totalorder %s174, %s175
      %p186 = scmp.eq.s32.totalorder %s25, 0
      %p187 = por %p185, %p186
      %p188 = scmp.ne.s32.totalorder %s174, %s175
      %p189 = scmp.eq.s32.totalorder %s26, 1
      %p190 = por %p188, %p189
      %p192 = scmp.ne.s32.totalorder %s175, %s191
      %p193 = scmp.eq.s32.totalorder %s26, 0
      %p194 = por %p192, %p193
      %p195 = scmp.le.s32.totalorder 1, %s20
      %p196 = scmp.lt.s32.totalorder %s20, 3
      %p197 = pnand %p195, %p196
      %p198 = pneg %p197
      // Predicated region
      $region9: #{tpu_custom_call.1} parent=5 // pred_check
        _
      $region10: #{tpu_custom_call.1} parent=5 // pred_check_branch
        %200 = sbr.rel (%p197) target = $region12
      $region11: #{tpu_custom_call.1} parent=5 // pred_region
        %s201 = ssub.s32 %s20, 1
        // Predicated region
        $region13: #{tpu_custom_call.1} parent=11 // pred_check
          %p202 = pneg %p119
        $region14: #{tpu_custom_call.1} parent=11 // pred_check_branch
          %204 = sbr.rel (%p202) target = $region16
        $region15: #{tpu_custom_call.1} parent=11 // pred_region
          %s206 = ssub.s32 512, 512
          %207 = vsyncadd [#allocation8], %s206
          %s208 = sshll.u32 [#allocation7], 4
          %s209 = int_to_ptr.vmem [resolvable:$true] %s208
          %214 = dma.hbm_to_vmem [thread:$0]  %s3, 512, %s209, [#allocation8], 128, 128, 8
        $region16: #{tpu_custom_call.1} parent=11 // pred_fallthru
          _
        // Predicated region
        $region17: #{tpu_custom_call.1} parent=11 // pred_check
          %p215 = pneg %p140
        $region18: #{tpu_custom_call.1} parent=11 // pred_check_branch
          %217 = sbr.rel (%p215) target = $region20
        $region19: #{tpu_custom_call.1} parent=11 // pred_region
          %s219 = ssub.s32 512, 512
          %220 = vsyncadd [#allocation8], %s219
          %s221 = sshll.u32 [#allocation9], 4
          %s222 = int_to_ptr.vmem [resolvable:$true] %s221
          %227 = dma.hbm_to_vmem [thread:$0]  %s4, 512, %s222, [#allocation8], 128, 128, 8
        $region20: #{tpu_custom_call.1} parent=11 // pred_fallthru
          _
        // Predicated region
        $region21: #{tpu_custom_call.1} parent=11 // pred_check
          %p228 = pneg %p161
        $region22: #{tpu_custom_call.1} parent=11 // pred_check_branch
          %230 = sbr.rel (%p228) target = $region24
        $region23: #{tpu_custom_call.1} parent=11 // pred_region
          %s232 = ssub.s32 512, 512
          %233 = vsyncadd [#allocation11], %s232
          %s234 = sshll.u32 [#allocation10], 4
          %s235 = int_to_ptr.vmem [resolvable:$true] %s234
          %240 = dma.hbm_to_vmem [thread:$0]  %s5, 512, %s235, [#allocation11], 128, 128, 8
        $region24: #{tpu_custom_call.1} parent=11 // pred_fallthru
          _
      $region12: #{tpu_custom_call.1} parent=5 // pred_fallthru
        _
      %p241 = scmp.lt.s32.totalorder %s20, 2
      // Predicated region
      $region25: #{tpu_custom_call.1} parent=5 // pred_check
        %p242 = pneg %p241
      $region26: #{tpu_custom_call.1} parent=5 // pred_check_branch
        %244 = sbr.rel (%p242) target = $region28
      $region27: #{tpu_custom_call.1} parent=5 // pred_region
        // Predicated region
        $region29: #{tpu_custom_call.1} parent=27 // pred_check
          %p245 = pneg %p40
        $region30: #{tpu_custom_call.1} parent=27 // pred_check_branch
          %247 = sbr.rel (%p245) target = $region32
        $region31: #{tpu_custom_call.1} parent=27 // pred_region
          %s248 = sand.u32 %s30, 1
          %s249 = scalar_lea.sflag [#allocation3], %s248
          %s250 = sand.u32 %s30, 1
          %s251 = smul.addr %s250, 8
          %s252 = scalar_lea.vmem [#allocation2], %s251
          %s254 = ssub.s32 128, 128
          %255 = vsyncadd %s249, %s254
          %s256 = smul.addr %s20, 128
          %s257 = scalar_lea.hbm %s0, %s256
          %s259 = sshll.u32 %s252, 4
          %s260 = int_to_ptr.vmem [resolvable:$true] %s259
          %262 = dma.hbm_to_vmem [thread:$0]  %s257, 128, %s260, %s249
        $region32: #{tpu_custom_call.1} parent=27 // pred_fallthru
          _
        // Predicated region
        $region33: #{tpu_custom_call.1} parent=27 // pred_check
          %p263 = pneg %p66
        $region34: #{tpu_custom_call.1} parent=27 // pred_check_branch
          %265 = sbr.rel (%p263) target = $region36
        $region35: #{tpu_custom_call.1} parent=27 // pred_region
          %s266 = sand.u32 %s20, 1
          %s267 = scalar_lea.sflag [#allocation5], %s266
          %s268 = sand.u32 %s56, 1
          %s269 = smul.addr %s268, 8
          %s270 = scalar_lea.vmem [#allocation4], %s269
          %s272 = ssub.s32 128, 128
          %273 = vsyncadd %s267, %s272
          %s274 = smul.addr %s20, 128
          %s275 = scalar_lea.hbm %s1, %s274
          %s277 = sshll.u32 %s270, 4
          %s278 = int_to_ptr.vmem [resolvable:$true] %s277
          %280 = dma.hbm_to_vmem [thread:$0]  %s275, 128, %s278, %s267
        $region36: #{tpu_custom_call.1} parent=27 // pred_fallthru
          _
        // Predicated region
        $region37: #{tpu_custom_call.1} parent=27 // pred_check
          %p281 = pneg %p92
        $region38: #{tpu_custom_call.1} parent=27 // pred_check_branch
          %283 = sbr.rel (%p281) target = $region40
        $region39: #{tpu_custom_call.1} parent=27 // pred_region
          %s284 = sand.u32 %s20, 1
          %s285 = scalar_lea.sflag [#allocation5], %s284
          %s286 = sand.u32 %s82, 1
          %s287 = smul.addr %s286, 8
          %s288 = scalar_lea.vmem [#allocation6], %s287
          %s290 = ssub.s32 128, 128
          %291 = vsyncadd %s285, %s290
          %s292 = smul.addr %s20, 128
          %s293 = scalar_lea.hbm %s2, %s292
          %s295 = sshll.u32 %s288, 4
          %s296 = int_to_ptr.vmem [resolvable:$true] %s295
          %298 = dma.hbm_to_vmem [thread:$0]  %s293, 128, %s296, %s285
        $region40: #{tpu_custom_call.1} parent=27 // pred_fallthru
          _
      $region28: #{tpu_custom_call.1} parent=5 // pred_fallthru
        _
      %p299 = scmp.le.s32.totalorder 1, %s20
      %p300 = scmp.lt.s32.totalorder %s20, 3
      %p301 = pnand %p299, %p300
      %p302 = pneg %p301
      // Predicated region
      $region41: #{tpu_custom_call.1} parent=5 // pred_check
        _
      $region42: #{tpu_custom_call.1} parent=5 // pred_check_branch
        %304 = sbr.rel (%p301) target = $region44
      $region43: #{tpu_custom_call.1} parent=5 // pred_region
        %s305 = ssub.s32 %s20, 1
        %s306 = sand.u32 %s33, 1
        %s307 = scalar_lea.sflag [#allocation3], %s306
        %s308 = sand.u32 %s33, 1
        %s309 = smul.addr %s308, 8
        %s310 = scalar_lea.vmem [#allocation2], %s309
        // Predicated region
        $region45: #{tpu_custom_call.1} parent=43 // pred_check
          %p311 = pneg %p46
        $region46: #{tpu_custom_call.1} parent=43 // pred_check_branch
          %313 = sbr.rel (%p311) target = $region48
        $region47: #{tpu_custom_call.1} parent=43 // pred_region
          %314 = dma.done %s307, 128
        $region48: #{tpu_custom_call.1} parent=43 // pred_fallthru
          _
        %s315 = sand.u32 %s25, 1
        %s316 = scalar_lea.sflag [#allocation5], %s315
        %s317 = sand.u32 %s59, 1
        %s318 = smul.addr %s317, 8
        %s319 = scalar_lea.vmem [#allocation4], %s318
        // Predicated region
        $region49: #{tpu_custom_call.1} parent=43 // pred_check
          %p320 = pneg %p72
        $region50: #{tpu_custom_call.1} parent=43 // pred_check_branch
          %322 = sbr.rel (%p320) target = $region52
        $region51: #{tpu_custom_call.1} parent=43 // pred_region
          %323 = dma.done %s316, 128
        $region52: #{tpu_custom_call.1} parent=43 // pred_fallthru
          _
        %s324 = sand.u32 %s25, 1
        %s325 = scalar_lea.sflag [#allocation5], %s324
        %s326 = sand.u32 %s85, 1
        %s327 = smul.addr %s326, 8
        %s328 = scalar_lea.vmem [#allocation6], %s327
        // Predicated region
        $region53: #{tpu_custom_call.1} parent=43 // pred_check
          %p329 = pneg %p98
        $region54: #{tpu_custom_call.1} parent=43 // pred_check_branch
          %331 = sbr.rel (%p329) target = $region56
        $region55: #{tpu_custom_call.1} parent=43 // pred_region
          %332 = dma.done %s325, 128
        $region56: #{tpu_custom_call.1} parent=43 // pred_fallthru
          _
        // Predicated region
        $region57: #{tpu_custom_call.1} parent=43 // pred_check
          %p333 = pneg %p119
        $region58: #{tpu_custom_call.1} parent=43 // pred_check_branch
          %335 = sbr.rel (%p333) target = $region60
        $region59: #{tpu_custom_call.1} parent=43 // pred_region
          %336 = dma.done [#allocation8], 512
        $region60: #{tpu_custom_call.1} parent=43 // pred_fallthru
          _
        // Predicated region
        $region61: #{tpu_custom_call.1} parent=43 // pred_check
          %p337 = pneg %p140
        $region62: #{tpu_custom_call.1} parent=43 // pred_check_branch
          %339 = sbr.rel (%p337) target = $region64
        $region63: #{tpu_custom_call.1} parent=43 // pred_region
          %340 = dma.done [#allocation8], 512
        $region64: #{tpu_custom_call.1} parent=43 // pred_fallthru
          _
        // Predicated region
        $region65: #{tpu_custom_call.1} parent=43 // pred_check
          %p341 = pneg %p161
        $region66: #{tpu_custom_call.1} parent=43 // pred_check_branch
          %343 = sbr.rel (%p341) target = $region68
        $region67: #{tpu_custom_call.1} parent=43 // pred_region
          %344 = dma.done [#allocation11], 512
        $region68: #{tpu_custom_call.1} parent=43 // pred_fallthru
          _
        %s345 = sand.u32 %s33, 1
        %s346 = scalar_lea.sflag [#allocation3], %s345
        %s347 = sand.u32 %s33, 1
        %s348 = smul.addr %s347, 8
        %s349 = scalar_lea.vmem [#allocation2], %s348
        %p350 = pneg %p46
        %p351 = pneg %p43
        %s352 = sand.u32 %s25, 1
        %s353 = scalar_lea.sflag [#allocation5], %s352
        %s354 = sand.u32 %s59, 1
        %s355 = smul.addr %s354, 8
        %s356 = scalar_lea.vmem [#allocation4], %s355
        %p357 = pneg %p72
        %p358 = pneg %p69
        %s359 = sand.u32 %s25, 1
        %s360 = scalar_lea.sflag [#allocation5], %s359
        %s361 = sand.u32 %s85, 1
        %s362 = smul.addr %s361, 8
        %s363 = scalar_lea.vmem [#allocation6], %s362
        %p364 = pneg %p98
        %p365 = pneg %p95
        %p366 = pneg %p119
        %p367 = pneg %p116
        %p368 = pneg %p140
        %p369 = pneg %p137
        %p370 = pneg %p161
        %p371 = pneg %p158
        %p372 = pneg %p187
        %p373 = pneg %p184
        %p374 = scmp.lt.s32.totalorder %s25, 1
        %s375 = scalar_select %p374, %s25, 1
        %s376 = smul.addr %s375, 4
        %s377 = smul.addr %s376, 8
        %s378 = scalar_lea.vmem %s6, %s377
        %p379 = scmp.lt.s32.totalorder %s25, 1
        %s380 = scalar_select %p379, %s25, 1
        %s381 = smul.addr %s380, 4
        %s382 = smul.addr %s381, 8
        %s383 = scalar_lea.vmem %s6, %s382
        %v384 = vld [vmem:[%s310] sm:$0xff]
        %v385 = vld [vmem:[%s319] sm:$0xff]
        %v386 = vld [vmem:[%s328] sm:$0xff]
        %v387 = vld [vmem:[#allocation7] sm:$0xff]
        %v388 = vld [vmem:[#allocation7 + $0x8] sm:$0xff]
        %v389 = vld [vmem:[#allocation7 + $0x10] sm:$0xff]
        %v390 = vld [vmem:[#allocation7 + $0x18] sm:$0xff]
        %vm391 = vcmask 261120
        %v393 = vsel %vm391, %v384, 0
        %395 = vmatprep.subr.mxu0 0.0
        %396 = vmatpush1.msra.mxu0 %v387
        %397 = vmatprep.subr.mxu0 0.0
        %398 = vmatpush1.msra.mxu0 %v388
        %399 = vmatprep.subr.mxu0 0.0
        %400 = vmatpush1.msra.mxu0 %v389
        %401 = vmatprep.subr.mxu0 0.0
        %402 = vmatpush1.msra.mxu0 %v390
        %403 = vmatprep.subr.mxu0 0.0
        %404 = vmatpush1.msra.mxu0 0.0
        %405 = vmatprep.subr.mxu0 0.0
        %406 = vmatpush1.msra.mxu0 0.0
        %407 = vmatprep.subr.mxu0 0.0
        %408 = vmatpush1.msra.mxu0 0.0
        %409 = vmatprep.subr.mxu0 0.0
        %410 = vmatpush1.msra.mxu0 0.0
        %411 = vmatprep.subr.mxu0 0.0
        %412 = vmatpush1.msra.mxu0 0.0
        %413 = vmatprep.subr.mxu0 0.0
        %414 = vmatpush1.msra.mxu0 0.0
        %415 = vmatprep.subr.mxu0 0.0
        %416 = vmatpush1.msra.mxu0 0.0
        %417 = vmatprep.subr.mxu0 0.0
        %418 = vmatpush1.msra.mxu0 0.0
        %419 = vmatprep.subr.mxu0 0.0
        %420 = vmatpush1.msra.mxu0 0.0
        %421 = vmatprep.subr.mxu0 0.0
        %422 = vmatpush1.msra.mxu0 0.0
        %423 = vmatprep.subr.mxu0 0.0
        %424 = vmatpush1.msra.mxu0 0.0
        %425 = vmatprep.subr.mxu0 0.0
        %426 = vmatpush1.msra.mxu0 0.0
        %427 = vmatprep.subr.mxu0 0.0
        %428 = vmatpush1.msra.mxu0 0.0
        %429 = vmatprep.subr.mxu0 0.0
        %430 = vmatpush1.msra.mxu0 0.0
        %431 = vmatprep.subr.mxu0 0.0
        %432 = vmatpush1.msra.mxu0 0.0
        %433 = vmatprep.subr.mxu0 0.0
        %434 = vmatpush1.msra.mxu0 0.0
        %435 = vmatprep.subr.mxu0 0.0
        %436 = vmatpush1.msra.mxu0 0.0
        %437 = vmatprep.subr.mxu0 0.0
        %438 = vmatpush1.msra.mxu0 0.0
        %439 = vmatprep.subr.mxu0 0.0
        %440 = vmatpush1.msra.mxu0 0.0
        %441 = vmatprep.subr.mxu0 0.0
        %442 = vmatpush1.msra.mxu0 0.0
        %443 = vmatprep.subr.mxu0 0.0
        %444 = vmatpush1.msra.mxu0 0.0
        %445 = vmatprep.subr.mxu0 0.0
        %446 = vmatpush1.msra.mxu0 0.0
        %447 = vmatprep.subr.mxu0 0.0
        %448 = vmatpush1.msra.mxu0 0.0
        %449 = vmatprep.subr.mxu0 0.0
        %450 = vmatpush1.msra.mxu0 0.0
        %451 = vmatprep.subr.mxu0 0.0
        %452 = vmatpush1.msra.mxu0 0.0
        %453 = vmatprep.subr.mxu0 0.0
        %454 = vmatpush1.msra.mxu0 0.0
        %455 = vmatprep.subr.mxu0 0.0
        %456 = vmatpush1.msra.mxu0 0.0
        %457 = vmatprep.subr.mxu0 0.0
        %458 = vmatpush1.msra.mxu0 0.0
        %459 = vmatprep.mubr.f32.mxu0 0.0
        %460 = vmatmul.mubr.f32.gmra.mrb[0].mxu0 %v393
        %v461 = vpop.f32.mrb[0].mxu0
        %v462 = vadd.f32 0.0, %v461
        %v463 = vpop.f32.mrb[0].mxu0
        %464 = vdwg.mxu0
        %v465 = vld [vmem:[#allocation9] sm:$0xff]
        %v466 = vld [vmem:[#allocation9 + $0x8] sm:$0xff]
        %v467 = vld [vmem:[#allocation9 + $0x10] sm:$0xff]
        %v468 = vld [vmem:[#allocation9 + $0x18] sm:$0xff]
        %v470 = vsel %vm391, %v385, 0
        %472 = vmatprep.subr.mxu0 0.0
        %473 = vmatpush1.msra.mxu0 %v465
        %474 = vmatprep.subr.mxu0 0.0
        %475 = vmatpush1.msra.mxu0 %v466
        %476 = vmatprep.subr.mxu0 0.0
        %477 = vmatpush1.msra.mxu0 %v467
        %478 = vmatprep.subr.mxu0 0.0
        %479 = vmatpush1.msra.mxu0 %v468
        %480 = vmatprep.subr.mxu0 0.0
        %481 = vmatpush1.msra.mxu0 0.0
        %482 = vmatprep.subr.mxu0 0.0
        %483 = vmatpush1.msra.mxu0 0.0
        %484 = vmatprep.subr.mxu0 0.0
        %485 = vmatpush1.msra.mxu0 0.0
        %486 = vmatprep.subr.mxu0 0.0
        %487 = vmatpush1.msra.mxu0 0.0
        %488 = vmatprep.subr.mxu0 0.0
        %489 = vmatpush1.msra.mxu0 0.0
        %490 = vmatprep.subr.mxu0 0.0
        %491 = vmatpush1.msra.mxu0 0.0
        %492 = vmatprep.subr.mxu0 0.0
        %493 = vmatpush1.msra.mxu0 0.0
        %494 = vmatprep.subr.mxu0 0.0
        %495 = vmatpush1.msra.mxu0 0.0
        %496 = vmatprep.subr.mxu0 0.0
        %497 = vmatpush1.msra.mxu0 0.0
        %498 = vmatprep.subr.mxu0 0.0
        %499 = vmatpush1.msra.mxu0 0.0
        %500 = vmatprep.subr.mxu0 0.0
        %501 = vmatpush1.msra.mxu0 0.0
        %502 = vmatprep.subr.mxu0 0.0
        %503 = vmatpush1.msra.mxu0 0.0
        %504 = vmatprep.subr.mxu0 0.0
        %505 = vmatpush1.msra.mxu0 0.0
        %506 = vmatprep.subr.mxu0 0.0
        %507 = vmatpush1.msra.mxu0 0.0
        %508 = vmatprep.subr.mxu0 0.0
        %509 = vmatpush1.msra.mxu0 0.0
        %510 = vmatprep.subr.mxu0 0.0
        %511 = vmatpush1.msra.mxu0 0.0
        %512 = vmatprep.subr.mxu0 0.0
        %513 = vmatpush1.msra.mxu0 0.0
        %514 = vmatprep.subr.mxu0 0.0
        %515 = vmatpush1.msra.mxu0 0.0
        %516 = vmatprep.subr.mxu0 0.0
        %517 = vmatpush1.msra.mxu0 0.0
        %518 = vmatprep.subr.mxu0 0.0
        %519 = vmatpush1.msra.mxu0 0.0
        %520 = vmatprep.subr.mxu0 0.0
        %521 = vmatpush1.msra.mxu0 0.0
        %522 = vmatprep.subr.mxu0 0.0
        %523 = vmatpush1.msra.mxu0 0.0
        %524 = vmatprep.subr.mxu0 0.0
        %525 = vmatpush1.msra.mxu0 0.0
        %526 = vmatprep.subr.mxu0 0.0
        %527 = vmatpush1.msra.mxu0 0.0
        %528 = vmatprep.subr.mxu0 0.0
        %529 = vmatpush1.msra.mxu0 0.0
        %530 = vmatprep.subr.mxu0 0.0
        %531 = vmatpush1.msra.mxu0 0.0
        %532 = vmatprep.subr.mxu0 0.0
        %533 = vmatpush1.msra.mxu0 0.0
        %534 = vmatprep.subr.mxu0 0.0
        %535 = vmatpush1.msra.mxu0 0.0
        %536 = vmatprep.mubr.f32.mxu0 0.0
        %537 = vmatmul.mubr.f32.gmra.mrb[0].mxu0 %v470
        %v538 = vpop.f32.mrb[0].mxu0
        %v539 = vadd.f32 0.0, %v538
        %v540 = vpop.f32.mrb[0].mxu0
        %541 = vdwg.mxu0
        %v542 = vld [vmem:[#allocation10] sm:$0xff]
        %v543 = vld [vmem:[#allocation10 + $0x8] sm:$0xff]
        %v544 = vld [vmem:[#allocation10 + $0x10] sm:$0xff]
        %v545 = vld [vmem:[#allocation10 + $0x18] sm:$0xff]
        %v547 = vsel %vm391, %v386, 0
        %549 = vmatprep.subr.mxu0 0.0
        %550 = vmatpush1.msra.mxu0 %v542
        %551 = vmatprep.subr.mxu0 0.0
        %552 = vmatpush1.msra.mxu0 %v543
        %553 = vmatprep.subr.mxu0 0.0
        %554 = vmatpush1.msra.mxu0 %v544
        %555 = vmatprep.subr.mxu0 0.0
        %556 = vmatpush1.msra.mxu0 %v545
        %557 = vmatprep.subr.mxu0 0.0
        %558 = vmatpush1.msra.mxu0 0.0
        %559 = vmatprep.subr.mxu0 0.0
        %560 = vmatpush1.msra.mxu0 0.0
        %561 = vmatprep.subr.mxu0 0.0
        %562 = vmatpush1.msra.mxu0 0.0
        %563 = vmatprep.subr.mxu0 0.0
        %564 = vmatpush1.msra.mxu0 0.0
        %565 = vmatprep.subr.mxu0 0.0
        %566 = vmatpush1.msra.mxu0 0.0
        %567 = vmatprep.subr.mxu0 0.0
        %568 = vmatpush1.msra.mxu0 0.0
        %569 = vmatprep.subr.mxu0 0.0
        %570 = vmatpush1.msra.mxu0 0.0
        %571 = vmatprep.subr.mxu0 0.0
        %572 = vmatpush1.msra.mxu0 0.0
        %573 = vmatprep.subr.mxu0 0.0
        %574 = vmatpush1.msra.mxu0 0.0
        %575 = vmatprep.subr.mxu0 0.0
        %576 = vmatpush1.msra.mxu0 0.0
        %577 = vmatprep.subr.mxu0 0.0
        %578 = vmatpush1.msra.mxu0 0.0
        %579 = vmatprep.subr.mxu0 0.0
        %580 = vmatpush1.msra.mxu0 0.0
        %581 = vmatprep.subr.mxu0 0.0
        %582 = vmatpush1.msra.mxu0 0.0
        %583 = vmatprep.subr.mxu0 0.0
        %584 = vmatpush1.msra.mxu0 0.0
        %585 = vmatprep.subr.mxu0 0.0
        %586 = vmatpush1.msra.mxu0 0.0
        %587 = vmatprep.subr.mxu0 0.0
        %588 = vmatpush1.msra.mxu0 0.0
        %589 = vmatprep.subr.mxu0 0.0
        %590 = vmatpush1.msra.mxu0 0.0
        %591 = vmatprep.subr.mxu0 0.0
        %592 = vmatpush1.msra.mxu0 0.0
        %593 = vmatprep.subr.mxu0 0.0
        %594 = vmatpush1.msra.mxu0 0.0
        %595 = vmatprep.subr.mxu0 0.0
        %596 = vmatpush1.msra.mxu0 0.0
        %597 = vmatprep.subr.mxu0 0.0
        %598 = vmatpush1.msra.mxu0 0.0
        %599 = vmatprep.subr.mxu0 0.0
        %600 = vmatpush1.msra.mxu0 0.0
        %601 = vmatprep.subr.mxu0 0.0
        %602 = vmatpush1.msra.mxu0 0.0
        %603 = vmatprep.subr.mxu0 0.0
        %604 = vmatpush1.msra.mxu0 0.0
        %605 = vmatprep.subr.mxu0 0.0
        %606 = vmatpush1.msra.mxu0 0.0
        %607 = vmatprep.subr.mxu0 0.0
        %608 = vmatpush1.msra.mxu0 0.0
        %609 = vmatprep.subr.mxu0 0.0
        %610 = vmatpush1.msra.mxu0 0.0
        %611 = vmatprep.subr.mxu0 0.0
        %612 = vmatpush1.msra.mxu0 0.0
        %613 = vmatprep.mubr.f32.mxu0 0.0
        %614 = vmatmul.mubr.f32.gmra.mrb[0].mxu0 %v547
        %v615 = vpop.f32.mrb[0].mxu0
        %v616 = vadd.f32 0.0, %v615
        %v617 = vpop.f32.mrb[0].mxu0
        %618 = vdwg.mxu0
        %vm619 = vcmask 64512
        %v621 = vsel %vm619, %v462, 0
        %v624 = vsel %vm619, %v539, 0
        %626 = vmatprep.subr.mxu0 0.0
        %627 = vmatpush1.xpose.msra.mxu0 %v624
        %628 = vmatprep.subr.mxu0 0.0
        %629 = vmatpush1.xpose.msra.mxu0 0.0
        %630 = vmatprep.subr.mxu0 0.0
        %631 = vmatpush1.xpose.msra.mxu0 0.0
        %632 = vmatprep.subr.mxu0 0.0
        %633 = vmatpush1.xpose.msra.mxu0 0.0
        %634 = vmatprep.subr.mxu0 0.0
        %635 = vmatpush1.xpose.msra.mxu0 0.0
        %636 = vmatprep.subr.mxu0 0.0
        %637 = vmatpush1.xpose.msra.mxu0 0.0
        %638 = vmatprep.subr.mxu0 0.0
        %639 = vmatpush1.xpose.msra.mxu0 0.0
        %640 = vmatprep.subr.mxu0 0.0
        %641 = vmatpush1.xpose.msra.mxu0 0.0
        %642 = vmatprep.subr.mxu0 0.0
        %643 = vmatpush1.xpose.msra.mxu0 0.0
        %644 = vmatprep.subr.mxu0 0.0
        %645 = vmatpush1.xpose.msra.mxu0 0.0
        %646 = vmatprep.subr.mxu0 0.0
        %647 = vmatpush1.xpose.msra.mxu0 0.0
        %648 = vmatprep.subr.mxu0 0.0
        %649 = vmatpush1.xpose.msra.mxu0 0.0
        %650 = vmatprep.subr.mxu0 0.0
        %651 = vmatpush1.xpose.msra.mxu0 0.0
        %652 = vmatprep.subr.mxu0 0.0
        %653 = vmatpush1.xpose.msra.mxu0 0.0
        %654 = vmatprep.subr.mxu0 0.0
        %655 = vmatpush1.xpose.msra.mxu0 0.0
        %656 = vmatprep.subr.mxu0 0.0
        %657 = vmatpush1.xpose.msra.mxu0 0.0
        %658 = vmatprep.subr.mxu0 0.0
        %659 = vmatpush1.xpose.msra.mxu0 0.0
        %660 = vmatprep.subr.mxu0 0.0
        %661 = vmatpush1.xpose.msra.mxu0 0.0
        %662 = vmatprep.subr.mxu0 0.0
        %663 = vmatpush1.xpose.msra.mxu0 0.0
        %664 = vmatprep.subr.mxu0 0.0
        %665 = vmatpush1.xpose.msra.mxu0 0.0
        %666 = vmatprep.subr.mxu0 0.0
        %667 = vmatpush1.xpose.msra.mxu0 0.0
        %668 = vmatprep.subr.mxu0 0.0
        %669 = vmatpush1.xpose.msra.mxu0 0.0
        %670 = vmatprep.subr.mxu0 0.0
        %671 = vmatpush1.xpose.msra.mxu0 0.0
        %672 = vmatprep.subr.mxu0 0.0
        %673 = vmatpush1.xpose.msra.mxu0 0.0
        %674 = vmatprep.subr.mxu0 0.0
        %675 = vmatpush1.xpose.msra.mxu0 0.0
        %676 = vmatprep.subr.mxu0 0.0
        %677 = vmatpush1.xpose.msra.mxu0 0.0
        %678 = vmatprep.subr.mxu0 0.0
        %679 = vmatpush1.xpose.msra.mxu0 0.0
        %680 = vmatprep.subr.mxu0 0.0
        %681 = vmatpush1.xpose.msra.mxu0 0.0
        %682 = vmatprep.subr.mxu0 0.0
        %683 = vmatpush1.xpose.msra.mxu0 0.0
        %684 = vmatprep.subr.mxu0 0.0
        %685 = vmatpush1.xpose.msra.mxu0 0.0
        %686 = vmatprep.subr.mxu0 0.0
        %687 = vmatpush1.xpose.msra.mxu0 0.0
        %688 = vmatprep.subr.mxu0 0.0
        %689 = vmatpush1.xpose.msra.mxu0 0.0
        %690 = vmatprep.mubr.f32.mxu0 0.0
        %691 = vmatmul.mubr.f32.gmra.mrb[0].mxu0 %v621
        %v692 = vpop.f32.mrb[0].mxu0
        %v693 = vadd.f32 0.0, %v692
        %v694 = vpop.f32.mrb[0].mxu0
        %695 = vdwg.mxu0
        %v696 = vmul.f32 %v693, 0.35355338
        %v697 = vsel %vm619, %v696, -inf
        %698 = vmax.xlane.f32.xlu0 %v697
        %v699 = vpop.xlane.xlu0 %698
        %v700 = vsub.f32 %v696, %v699
        %v701 = vmul.f32 %v700, 1.442695
        %v702 = vpow.pop %v701
        %v703 = vsel %vm619, %v702, 0.0
        %704 = vadd.xlane.f32.xlu0 %v703
        %v705 = vpop.xlane.xlu0 %704
        %v707 = vsel %vm619, %v702, 0
        %709 = vmatprep.subr.mxu0 0.0
        %710 = vmatpush1.msra.mxu0 %v616
        %711 = vmatprep.subr.mxu0 0.0
        %712 = vmatpush1.msra.mxu0 0.0
        %713 = vmatprep.subr.mxu0 0.0
        %714 = vmatpush1.msra.mxu0 0.0
        %715 = vmatprep.subr.mxu0 0.0
        %716 = vmatpush1.msra.mxu0 0.0
        %717 = vmatprep.subr.mxu0 0.0
        %718 = vmatpush1.msra.mxu0 0.0
        %719 = vmatprep.subr.mxu0 0.0
        %720 = vmatpush1.msra.mxu0 0.0
        %721 = vmatprep.subr.mxu0 0.0
        %722 = vmatpush1.msra.mxu0 0.0
        %723 = vmatprep.subr.mxu0 0.0
        %724 = vmatpush1.msra.mxu0 0.0
        %725 = vmatprep.subr.mxu0 0.0
        %726 = vmatpush1.msra.mxu0 0.0
        %727 = vmatprep.subr.mxu0 0.0
        %728 = vmatpush1.msra.mxu0 0.0
        %729 = vmatprep.subr.mxu0 0.0
        %730 = vmatpush1.msra.mxu0 0.0
        %731 = vmatprep.subr.mxu0 0.0
        %732 = vmatpush1.msra.mxu0 0.0
        %733 = vmatprep.subr.mxu0 0.0
        %734 = vmatpush1.msra.mxu0 0.0
        %735 = vmatprep.subr.mxu0 0.0
        %736 = vmatpush1.msra.mxu0 0.0
        %737 = vmatprep.subr.mxu0 0.0
        %738 = vmatpush1.msra.mxu0 0.0
        %739 = vmatprep.subr.mxu0 0.0
        %740 = vmatpush1.msra.mxu0 0.0
        %741 = vmatprep.subr.mxu0 0.0
        %742 = vmatpush1.msra.mxu0 0.0
        %743 = vmatprep.subr.mxu0 0.0
        %744 = vmatpush1.msra.mxu0 0.0
        %745 = vmatprep.subr.mxu0 0.0
        %746 = vmatpush1.msra.mxu0 0.0
        %747 = vmatprep.subr.mxu0 0.0
        %748 = vmatpush1.msra.mxu0 0.0
        %749 = vmatprep.subr.mxu0 0.0
        %750 = vmatpush1.msra.mxu0 0.0
        %751 = vmatprep.subr.mxu0 0.0
        %752 = vmatpush1.msra.mxu0 0.0
        %753 = vmatprep.subr.mxu0 0.0
        %754 = vmatpush1.msra.mxu0 0.0
        %755 = vmatprep.subr.mxu0 0.0
        %756 = vmatpush1.msra.mxu0 0.0
        %757 = vmatprep.subr.mxu0 0.0
        %758 = vmatpush1.msra.mxu0 0.0
        %759 = vmatprep.subr.mxu0 0.0
        %760 = vmatpush1.msra.mxu0 0.0
        %761 = vmatprep.subr.mxu0 0.0
        %762 = vmatpush1.msra.mxu0 0.0
        %763 = vmatprep.subr.mxu0 0.0
        %764 = vmatpush1.msra.mxu0 0.0
        %765 = vmatprep.subr.mxu0 0.0
        %766 = vmatpush1.msra.mxu0 0.0
        %767 = vmatprep.subr.mxu0 0.0
        %768 = vmatpush1.msra.mxu0 0.0
        %769 = vmatprep.subr.mxu0 0.0
        %770 = vmatpush1.msra.mxu0 0.0
        %771 = vmatprep.subr.mxu0 0.0
        %772 = vmatpush1.msra.mxu0 0.0
        %773 = vmatprep.mubr.f32.mxu0 0.0
        %774 = vmatmul.mubr.f32.gmra.mrb[0].mxu0 %v707
        %v775 = vpop.f32.mrb[0].mxu0
        %v776 = vadd.f32 0.0, %v775
        %v777 = vpop.f32.mrb[0].mxu0
        %778 = vdwg.mxu0
        %v779 = vrcp.pop %v705
        %v780 = vmul.f32 %v776, %v779
        %781 = vst.msk [vmem:[%s383] sm:$0xff] %vm619, %v780
        %782 = vrot.lane.b32.xlu0 %v462, 120
        %v783 = vpop.permute.xlu0 %782
        %784 = vrot.lane.b32.xlu0 %v539, 120
        %v785 = vpop.permute.xlu0 %784
        %v786 = vsel %vm619, %v783, 0
        %v788 = vsel %vm619, %v785, 0
        %790 = vmatprep.subr.mxu0 0.0
        %791 = vmatpush1.xpose.msra.mxu0 %v788
        %792 = vmatprep.subr.mxu0 0.0
        %793 = vmatpush1.xpose.msra.mxu0 0.0
        %794 = vmatprep.subr.mxu0 0.0
        %795 = vmatpush1.xpose.msra.mxu0 0.0
        %796 = vmatprep.subr.mxu0 0.0
        %797 = vmatpush1.xpose.msra.mxu0 0.0
        %798 = vmatprep.subr.mxu0 0.0
        %799 = vmatpush1.xpose.msra.mxu0 0.0
        %800 = vmatprep.subr.mxu0 0.0
        %801 = vmatpush1.xpose.msra.mxu0 0.0
        %802 = vmatprep.subr.mxu0 0.0
        %803 = vmatpush1.xpose.msra.mxu0 0.0
        %804 = vmatprep.subr.mxu0 0.0
        %805 = vmatpush1.xpose.msra.mxu0 0.0
        %806 = vmatprep.subr.mxu0 0.0
        %807 = vmatpush1.xpose.msra.mxu0 0.0
        %808 = vmatprep.subr.mxu0 0.0
        %809 = vmatpush1.xpose.msra.mxu0 0.0
        %810 = vmatprep.subr.mxu0 0.0
        %811 = vmatpush1.xpose.msra.mxu0 0.0
        %812 = vmatprep.subr.mxu0 0.0
        %813 = vmatpush1.xpose.msra.mxu0 0.0
        %814 = vmatprep.subr.mxu0 0.0
        %815 = vmatpush1.xpose.msra.mxu0 0.0
        %816 = vmatprep.subr.mxu0 0.0
        %817 = vmatpush1.xpose.msra.mxu0 0.0
        %818 = vmatprep.subr.mxu0 0.0
        %819 = vmatpush1.xpose.msra.mxu0 0.0
        %820 = vmatprep.subr.mxu0 0.0
        %821 = vmatpush1.xpose.msra.mxu0 0.0
        %822 = vmatprep.subr.mxu0 0.0
        %823 = vmatpush1.xpose.msra.mxu0 0.0
        %824 = vmatprep.subr.mxu0 0.0
        %825 = vmatpush1.xpose.msra.mxu0 0.0
        %826 = vmatprep.subr.mxu0 0.0
        %827 = vmatpush1.xpose.msra.mxu0 0.0
        %828 = vmatprep.subr.mxu0 0.0
        %829 = vmatpush1.xpose.msra.mxu0 0.0
        %830 = vmatprep.subr.mxu0 0.0
        %831 = vmatpush1.xpose.msra.mxu0 0.0
        %832 = vmatprep.subr.mxu0 0.0
        %833 = vmatpush1.xpose.msra.mxu0 0.0
        %834 = vmatprep.subr.mxu0 0.0
        %835 = vmatpush1.xpose.msra.mxu0 0.0
        %836 = vmatprep.subr.mxu0 0.0
        %837 = vmatpush1.xpose.msra.mxu0 0.0
        %838 = vmatprep.subr.mxu0 0.0
        %839 = vmatpush1.xpose.msra.mxu0 0.0
        %840 = vmatprep.subr.mxu0 0.0
        %841 = vmatpush1.xpose.msra.mxu0 0.0
        %842 = vmatprep.subr.mxu0 0.0
        %843 = vmatpush1.xpose.msra.mxu0 0.0
        %844 = vmatprep.subr.mxu0 0.0
        %845 = vmatpush1.xpose.msra.mxu0 0.0
        %846 = vmatprep.subr.mxu0 0.0
        %847 = vmatpush1.xpose.msra.mxu0 0.0
        %848 = vmatprep.subr.mxu0 0.0
        %849 = vmatpush1.xpose.msra.mxu0 0.0
        %850 = vmatprep.subr.mxu0 0.0
        %851 = vmatpush1.xpose.msra.mxu0 0.0
        %852 = vmatprep.subr.mxu0 0.0
        %853 = vmatpush1.xpose.msra.mxu0 0.0
        %854 = vmatprep.mubr.f32.mxu0 0.0
        %855 = vmatmul.mubr.f32.gmra.mrb[0].mxu0 %v786
        %v856 = vpop.f32.mrb[0].mxu0
        %v857 = vadd.f32 0.0, %v856
        %v858 = vpop.f32.mrb[0].mxu0
        %859 = vdwg.mxu0
        %v860 = vmul.f32 %v857, 0.35355338
        %v861 = vsel %vm619, %v860, -inf
        %862 = vmax.xlane.f32.xlu0 %v861
        %v863 = vpop.xlane.xlu0 %862
        %v864 = vsub.f32 %v860, %v863
        %v865 = vmul.f32 %v864, 1.442695
        %v866 = vpow.pop %v865
        %v867 = vsel %vm619, %v866, 0.0
        %868 = vadd.xlane.f32.xlu0 %v867
        %v869 = vpop.xlane.xlu0 %868
        %871 = vrot.lane.b32.xlu0 %v616, 120
        %v872 = vpop.permute.xlu0 %871
        %v875 = vsel %vm619, %v866, 0
        %877 = vmatprep.subr.mxu0 0.0
        %878 = vmatpush1.msra.mxu0 %v872
        %879 = vmatprep.subr.mxu0 0.0
        %880 = vmatpush1.msra.mxu0 0.0
        %881 = vmatprep.subr.mxu0 0.0
        %882 = vmatpush1.msra.mxu0 0.0
        %883 = vmatprep.subr.mxu0 0.0
        %884 = vmatpush1.msra.mxu0 0.0
        %885 = vmatprep.subr.mxu0 0.0
        %886 = vmatpush1.msra.mxu0 0.0
        %887 = vmatprep.subr.mxu0 0.0
        %888 = vmatpush1.msra.mxu0 0.0
        %889 = vmatprep.subr.mxu0 0.0
        %890 = vmatpush1.msra.mxu0 0.0
        %891 = vmatprep.subr.mxu0 0.0
        %892 = vmatpush1.msra.mxu0 0.0
        %893 = vmatprep.subr.mxu0 0.0
        %894 = vmatpush1.msra.mxu0 0.0
        %895 = vmatprep.subr.mxu0 0.0
        %896 = vmatpush1.msra.mxu0 0.0
        %897 = vmatprep.subr.mxu0 0.0
        %898 = vmatpush1.msra.mxu0 0.0
        %899 = vmatprep.subr.mxu0 0.0
        %900 = vmatpush1.msra.mxu0 0.0
        %901 = vmatprep.subr.mxu0 0.0
        %902 = vmatpush1.msra.mxu0 0.0
        %903 = vmatprep.subr.mxu0 0.0
        %904 = vmatpush1.msra.mxu0 0.0
        %905 = vmatprep.subr.mxu0 0.0
        %906 = vmatpush1.msra.mxu0 0.0
        %907 = vmatprep.subr.mxu0 0.0
        %908 = vmatpush1.msra.mxu0 0.0
        %909 = vmatprep.subr.mxu0 0.0
        %910 = vmatpush1.msra.mxu0 0.0
        %911 = vmatprep.subr.mxu0 0.0
        %912 = vmatpush1.msra.mxu0 0.0
        %913 = vmatprep.subr.mxu0 0.0
        %914 = vmatpush1.msra.mxu0 0.0
        %915 = vmatprep.subr.mxu0 0.0
        %916 = vmatpush1.msra.mxu0 0.0
        %917 = vmatprep.subr.mxu0 0.0
        %918 = vmatpush1.msra.mxu0 0.0
        %919 = vmatprep.subr.mxu0 0.0
        %920 = vmatpush1.msra.mxu0 0.0
        %921 = vmatprep.subr.mxu0 0.0
        %922 = vmatpush1.msra.mxu0 0.0
        %923 = vmatprep.subr.mxu0 0.0
        %924 = vmatpush1.msra.mxu0 0.0
        %925 = vmatprep.subr.mxu0 0.0
        %926 = vmatpush1.msra.mxu0 0.0
        %927 = vmatprep.subr.mxu0 0.0
        %928 = vmatpush1.msra.mxu0 0.0
        %929 = vmatprep.subr.mxu0 0.0
        %930 = vmatpush1.msra.mxu0 0.0
        %931 = vmatprep.subr.mxu0 0.0
        %932 = vmatpush1.msra.mxu0 0.0
        %933 = vmatprep.subr.mxu0 0.0
        %934 = vmatpush1.msra.mxu0 0.0
        %935 = vmatprep.subr.mxu0 0.0
        %936 = vmatpush1.msra.mxu0 0.0
        %937 = vmatprep.subr.mxu0 0.0
        %938 = vmatpush1.msra.mxu0 0.0
        %939 = vmatprep.subr.mxu0 0.0
        %940 = vmatpush1.msra.mxu0 0.0
        %941 = vmatprep.mubr.f32.mxu0 0.0
        %942 = vmatmul.mubr.f32.gmra.mrb[0].mxu0 %v875
        %v943 = vpop.f32.mrb[0].mxu0
        %v944 = vadd.f32 0.0, %v943
        %v945 = vpop.f32.mrb[0].mxu0
        %946 = vdwg.mxu0
        %v947 = vrcp.pop %v869
        %v948 = vmul.f32 %v944, %v947
        %949 = vst.msk [vmem:[%s383 + $0x8] sm:$0xff] %vm619, %v948
        %950 = vrot.lane.b32.xlu0 %v462, 112
        %v951 = vpop.permute.xlu0 %950
        %952 = vrot.lane.b32.xlu0 %v539, 112
        %v953 = vpop.permute.xlu0 %952
        %v954 = vsel %vm619, %v951, 0
        %v956 = vsel %vm619, %v953, 0
        %958 = vmatprep.subr.mxu0 0.0
        %959 = vmatpush1.xpose.msra.mxu0 %v956
        %960 = vmatprep.subr.mxu0 0.0
        %961 = vmatpush1.xpose.msra.mxu0 0.0
        %962 = vmatprep.subr.mxu0 0.0
        %963 = vmatpush1.xpose.msra.mxu0 0.0
        %964 = vmatprep.subr.mxu0 0.0
        %965 = vmatpush1.xpose.msra.mxu0 0.0
        %966 = vmatprep.subr.mxu0 0.0
        %967 = vmatpush1.xpose.msra.mxu0 0.0
        %968 = vmatprep.subr.mxu0 0.0
        %969 = vmatpush1.xpose.msra.mxu0 0.0
        %970 = vmatprep.subr.mxu0 0.0
        %971 = vmatpush1.xpose.msra.mxu0 0.0
        %972 = vmatprep.subr.mxu0 0.0
        %973 = vmatpush1.xpose.msra.mxu0 0.0
        %974 = vmatprep.subr.mxu0 0.0
        %975 = vmatpush1.xpose.msra.mxu0 0.0
        %976 = vmatprep.subr.mxu0 0.0
        %977 = vmatpush1.xpose.msra.mxu0 0.0
        %978 = vmatprep.subr.mxu0 0.0
        %979 = vmatpush1.xpose.msra.mxu0 0.0
        %980 = vmatprep.subr.mxu0 0.0
        %981 = vmatpush1.xpose.msra.mxu0 0.0
        %982 = vmatprep.subr.mxu0 0.0
        %983 = vmatpush1.xpose.msra.mxu0 0.0
        %984 = vmatprep.subr.mxu0 0.0
        %985 = vmatpush1.xpose.msra.mxu0 0.0
        %986 = vmatprep.subr.mxu0 0.0
        %987 = vmatpush1.xpose.msra.mxu0 0.0
        %988 = vmatprep.subr.mxu0 0.0
        %989 = vmatpush1.xpose.msra.mxu0 0.0
        %990 = vmatprep.subr.mxu0 0.0
        %991 = vmatpush1.xpose.msra.mxu0 0.0
        %992 = vmatprep.subr.mxu0 0.0
        %993 = vmatpush1.xpose.msra.mxu0 0.0
        %994 = vmatprep.subr.mxu0 0.0
        %995 = vmatpush1.xpose.msra.mxu0 0.0
        %996 = vmatprep.subr.mxu0 0.0
        %997 = vmatpush1.xpose.msra.mxu0 0.0
        %998 = vmatprep.subr.mxu0 0.0
        %999 = vmatpush1.xpose.msra.mxu0 0.0
        %1000 = vmatprep.subr.mxu0 0.0
        %1001 = vmatpush1.xpose.msra.mxu0 0.0
        %1002 = vmatprep.subr.mxu0 0.0
        %1003 = vmatpush1.xpose.msra.mxu0 0.0
        %1004 = vmatprep.subr.mxu0 0.0
        %1005 = vmatpush1.xpose.msra.mxu0 0.0
        %1006 = vmatprep.subr.mxu0 0.0
        %1007 = vmatpush1.xpose.msra.mxu0 0.0
        %1008 = vmatprep.subr.mxu0 0.0
        %1009 = vmatpush1.xpose.msra.mxu0 0.0
        %1010 = vmatprep.subr.mxu0 0.0
        %1011 = vmatpush1.xpose.msra.mxu0 0.0
        %1012 = vmatprep.subr.mxu0 0.0
        %1013 = vmatpush1.xpose.msra.mxu0 0.0
        %1014 = vmatprep.subr.mxu0 0.0
        %1015 = vmatpush1.xpose.msra.mxu0 0.0
        %1016 = vmatprep.subr.mxu0 0.0
        %1017 = vmatpush1.xpose.msra.mxu0 0.0
        %1018 = vmatprep.subr.mxu0 0.0
        %1019 = vmatpush1.xpose.msra.mxu0 0.0
        %1020 = vmatprep.subr.mxu0 0.0
        %1021 = vmatpush1.xpose.msra.mxu0 0.0
        %1022 = vmatprep.mubr.f32.mxu0 0.0
        %1023 = vmatmul.mubr.f32.gmra.mrb[0].mxu0 %v954
        %v1024 = vpop.f32.mrb[0].mxu0
        %v1025 = vadd.f32 0.0, %v1024
        %v1026 = vpop.f32.mrb[0].mxu0
        %1027 = vdwg.mxu0
        %v1028 = vmul.f32 %v1025, 0.35355338
        %v1029 = vsel %vm619, %v1028, -inf
        %1030 = vmax.xlane.f32.xlu0 %v1029
        %v1031 = vpop.xlane.xlu0 %1030
        %v1032 = vsub.f32 %v1028, %v1031
        %v1033 = vmul.f32 %v1032, 1.442695
        %v1034 = vpow.pop %v1033
        %v1035 = vsel %vm619, %v1034, 0.0
        %1036 = vadd.xlane.f32.xlu0 %v1035
        %v1037 = vpop.xlane.xlu0 %1036
        %1038 = vrot.lane.b32.xlu0 %v616, 112
        %v1039 = vpop.permute.xlu0 %1038
        %v1042 = vsel %vm619, %v1034, 0
        %1044 = vmatprep.subr.mxu0 0.0
        %1045 = vmatpush1.msra.mxu0 %v1039
        %1046 = vmatprep.subr.mxu0 0.0
        %1047 = vmatpush1.msra.mxu0 0.0
        %1048 = vmatprep.subr.mxu0 0.0
        %1049 = vmatpush1.msra.mxu0 0.0
        %1050 = vmatprep.subr.mxu0 0.0
        %1051 = vmatpush1.msra.mxu0 0.0
        %1052 = vmatprep.subr.mxu0 0.0
        %1053 = vmatpush1.msra.mxu0 0.0
        %1054 = vmatprep.subr.mxu0 0.0
        %1055 = vmatpush1.msra.mxu0 0.0
        %1056 = vmatprep.subr.mxu0 0.0
        %1057 = vmatpush1.msra.mxu0 0.0
        %1058 = vmatprep.subr.mxu0 0.0
        %1059 = vmatpush1.msra.mxu0 0.0
        %1060 = vmatprep.subr.mxu0 0.0
        %1061 = vmatpush1.msra.mxu0 0.0
        %1062 = vmatprep.subr.mxu0 0.0
        %1063 = vmatpush1.msra.mxu0 0.0
        %1064 = vmatprep.subr.mxu0 0.0
        %1065 = vmatpush1.msra.mxu0 0.0
        %1066 = vmatprep.subr.mxu0 0.0
        %1067 = vmatpush1.msra.mxu0 0.0
        %1068 = vmatprep.subr.mxu0 0.0
        %1069 = vmatpush1.msra.mxu0 0.0
        %1070 = vmatprep.subr.mxu0 0.0
        %1071 = vmatpush1.msra.mxu0 0.0
        %1072 = vmatprep.subr.mxu0 0.0
        %1073 = vmatpush1.msra.mxu0 0.0
        %1074 = vmatprep.subr.mxu0 0.0
        %1075 = vmatpush1.msra.mxu0 0.0
        %1076 = vmatprep.subr.mxu0 0.0
        %1077 = vmatpush1.msra.mxu0 0.0
        %1078 = vmatprep.subr.mxu0 0.0
        %1079 = vmatpush1.msra.mxu0 0.0
        %1080 = vmatprep.subr.mxu0 0.0
        %1081 = vmatpush1.msra.mxu0 0.0
        %1082 = vmatprep.subr.mxu0 0.0
        %1083 = vmatpush1.msra.mxu0 0.0
        %1084 = vmatprep.subr.mxu0 0.0
        %1085 = vmatpush1.msra.mxu0 0.0
        %1086 = vmatprep.subr.mxu0 0.0
        %1087 = vmatpush1.msra.mxu0 0.0
        %1088 = vmatprep.subr.mxu0 0.0
        %1089 = vmatpush1.msra.mxu0 0.0
        %1090 = vmatprep.subr.mxu0 0.0
        %1091 = vmatpush1.msra.mxu0 0.0
        %1092 = vmatprep.subr.mxu0 0.0
        %1093 = vmatpush1.msra.mxu0 0.0
        %1094 = vmatprep.subr.mxu0 0.0
        %1095 = vmatpush1.msra.mxu0 0.0
        %1096 = vmatprep.subr.mxu0 0.0
        %1097 = vmatpush1.msra.mxu0 0.0
        %1098 = vmatprep.subr.mxu0 0.0
        %1099 = vmatpush1.msra.mxu0 0.0
        %1100 = vmatprep.subr.mxu0 0.0
        %1101 = vmatpush1.msra.mxu0 0.0
        %1102 = vmatprep.subr.mxu0 0.0
        %1103 = vmatpush1.msra.mxu0 0.0
        %1104 = vmatprep.subr.mxu0 0.0
        %1105 = vmatpush1.msra.mxu0 0.0
        %1106 = vmatprep.subr.mxu0 0.0
        %1107 = vmatpush1.msra.mxu0 0.0
        %1108 = vmatprep.mubr.f32.mxu0 0.0
        %1109 = vmatmul.mubr.f32.gmra.mrb[0].mxu0 %v1042
        %v1110 = vpop.f32.mrb[0].mxu0
        %v1111 = vadd.f32 0.0, %v1110
        %v1112 = vpop.f32.mrb[0].mxu0
        %1113 = vdwg.mxu0
        %v1114 = vrcp.pop %v1037
        %v1115 = vmul.f32 %v1111, %v1114
        %1116 = vst.msk [vmem:[%s383 + $0x10] sm:$0xff] %vm619, %v1115
        %1117 = vrot.lane.b32.xlu0 %v462, 104
        %v1118 = vpop.permute.xlu0 %1117
        %1119 = vrot.lane.b32.xlu0 %v539, 104
        %v1120 = vpop.permute.xlu0 %1119
        %v1121 = vsel %vm619, %v1118, 0
        %v1123 = vsel %vm619, %v1120, 0
        %1125 = vmatprep.subr.mxu0 0.0
        %1126 = vmatpush1.xpose.msra.mxu0 %v1123
        %1127 = vmatprep.subr.mxu0 0.0
        %1128 = vmatpush1.xpose.msra.mxu0 0.0
        %1129 = vmatprep.subr.mxu0 0.0
        %1130 = vmatpush1.xpose.msra.mxu0 0.0
        %1131 = vmatprep.subr.mxu0 0.0
        %1132 = vmatpush1.xpose.msra.mxu0 0.0
        %1133 = vmatprep.subr.mxu0 0.0
        %1134 = vmatpush1.xpose.msra.mxu0 0.0
        %1135 = vmatprep.subr.mxu0 0.0
        %1136 = vmatpush1.xpose.msra.mxu0 0.0
        %1137 = vmatprep.subr.mxu0 0.0
        %1138 = vmatpush1.xpose.msra.mxu0 0.0
        %1139 = vmatprep.subr.mxu0 0.0
        %1140 = vmatpush1.xpose.msra.mxu0 0.0
        %1141 = vmatprep.subr.mxu0 0.0
        %1142 = vmatpush1.xpose.msra.mxu0 0.0
        %1143 = vmatprep.subr.mxu0 0.0
        %1144 = vmatpush1.xpose.msra.mxu0 0.0
        %1145 = vmatprep.subr.mxu0 0.0
        %1146 = vmatpush1.xpose.msra.mxu0 0.0
        %1147 = vmatprep.subr.mxu0 0.0
        %1148 = vmatpush1.xpose.msra.mxu0 0.0
        %1149 = vmatprep.subr.mxu0 0.0
        %1150 = vmatpush1.xpose.msra.mxu0 0.0
        %1151 = vmatprep.subr.mxu0 0.0
        %1152 = vmatpush1.xpose.msra.mxu0 0.0
        %1153 = vmatprep.subr.mxu0 0.0
        %1154 = vmatpush1.xpose.msra.mxu0 0.0
        %1155 = vmatprep.subr.mxu0 0.0
        %1156 = vmatpush1.xpose.msra.mxu0 0.0
        %1157 = vmatprep.subr.mxu0 0.0
        %1158 = vmatpush1.xpose.msra.mxu0 0.0
        %1159 = vmatprep.subr.mxu0 0.0
        %1160 = vmatpush1.xpose.msra.mxu0 0.0
        %1161 = vmatprep.subr.mxu0 0.0
        %1162 = vmatpush1.xpose.msra.mxu0 0.0
        %1163 = vmatprep.subr.mxu0 0.0
        %1164 = vmatpush1.xpose.msra.mxu0 0.0
        %1165 = vmatprep.subr.mxu0 0.0
        %1166 = vmatpush1.xpose.msra.mxu0 0.0
        %1167 = vmatprep.subr.mxu0 0.0
        %1168 = vmatpush1.xpose.msra.mxu0 0.0
        %1169 = vmatprep.subr.mxu0 0.0
        %1170 = vmatpush1.xpose.msra.mxu0 0.0
        %1171 = vmatprep.subr.mxu0 0.0
        %1172 = vmatpush1.xpose.msra.mxu0 0.0
        %1173 = vmatprep.subr.mxu0 0.0
        %1174 = vmatpush1.xpose.msra.mxu0 0.0
        %1175 = vmatprep.subr.mxu0 0.0
        %1176 = vmatpush1.xpose.msra.mxu0 0.0
        %1177 = vmatprep.subr.mxu0 0.0
        %1178 = vmatpush1.xpose.msra.mxu0 0.0
        %1179 = vmatprep.subr.mxu0 0.0
        %1180 = vmatpush1.xpose.msra.mxu0 0.0
        %1181 = vmatprep.subr.mxu0 0.0
        %1182 = vmatpush1.xpose.msra.mxu0 0.0
        %1183 = vmatprep.subr.mxu0 0.0
        %1184 = vmatpush1.xpose.msra.mxu0 0.0
        %1185 = vmatprep.subr.mxu0 0.0
        %1186 = vmatpush1.xpose.msra.mxu0 0.0
        %1187 = vmatprep.subr.mxu0 0.0
        %1188 = vmatpush1.xpose.msra.mxu0 0.0
        %1189 = vmatprep.mubr.f32.mxu0 0.0
        %1190 = vmatmul.mubr.f32.gmra.mrb[0].mxu0 %v1121
        %v1191 = vpop.f32.mrb[0].mxu0
        %v1192 = vadd.f32 0.0, %v1191
        %v1193 = vpop.f32.mrb[0].mxu0
        %1194 = vdwg.mxu0
        %v1195 = vmul.f32 %v1192, 0.35355338
        %v1196 = vsel %vm619, %v1195, -inf
        %1197 = vmax.xlane.f32.xlu0 %v1196
        %v1198 = vpop.xlane.xlu0 %1197
        %v1199 = vsub.f32 %v1195, %v1198
        %v1200 = vmul.f32 %v1199, 1.442695
        %v1201 = vpow.pop %v1200
        %v1202 = vsel %vm619, %v1201, 0.0
        %1203 = vadd.xlane.f32.xlu0 %v1202
        %v1204 = vpop.xlane.xlu0 %1203
        %1205 = vrot.lane.b32.xlu0 %v616, 104
        %v1206 = vpop.permute.xlu0 %1205
        %v1209 = vsel %vm619, %v1201, 0
        %1211 = vmatprep.subr.mxu0 0.0
        %1212 = vmatpush1.msra.mxu0 %v1206
        %1213 = vmatprep.subr.mxu0 0.0
        %1214 = vmatpush1.msra.mxu0 0.0
        %1215 = vmatprep.subr.mxu0 0.0
        %1216 = vmatpush1.msra.mxu0 0.0
        %1217 = vmatprep.subr.mxu0 0.0
        %1218 = vmatpush1.msra.mxu0 0.0
        %1219 = vmatprep.subr.mxu0 0.0
        %1220 = vmatpush1.msra.mxu0 0.0
        %1221 = vmatprep.subr.mxu0 0.0
        %1222 = vmatpush1.msra.mxu0 0.0
        %1223 = vmatprep.subr.mxu0 0.0
        %1224 = vmatpush1.msra.mxu0 0.0
        %1225 = vmatprep.subr.mxu0 0.0
        %1226 = vmatpush1.msra.mxu0 0.0
        %1227 = vmatprep.subr.mxu0 0.0
        %1228 = vmatpush1.msra.mxu0 0.0
        %1229 = vmatprep.subr.mxu0 0.0
        %1230 = vmatpush1.msra.mxu0 0.0
        %1231 = vmatprep.subr.mxu0 0.0
        %1232 = vmatpush1.msra.mxu0 0.0
        %1233 = vmatprep.subr.mxu0 0.0
        %1234 = vmatpush1.msra.mxu0 0.0
        %1235 = vmatprep.subr.mxu0 0.0
        %1236 = vmatpush1.msra.mxu0 0.0
        %1237 = vmatprep.subr.mxu0 0.0
        %1238 = vmatpush1.msra.mxu0 0.0
        %1239 = vmatprep.subr.mxu0 0.0
        %1240 = vmatpush1.msra.mxu0 0.0
        %1241 = vmatprep.subr.mxu0 0.0
        %1242 = vmatpush1.msra.mxu0 0.0
        %1243 = vmatprep.subr.mxu0 0.0
        %1244 = vmatpush1.msra.mxu0 0.0
        %1245 = vmatprep.subr.mxu0 0.0
        %1246 = vmatpush1.msra.mxu0 0.0
        %1247 = vmatprep.subr.mxu0 0.0
        %1248 = vmatpush1.msra.mxu0 0.0
        %1249 = vmatprep.subr.mxu0 0.0
        %1250 = vmatpush1.msra.mxu0 0.0
        %1251 = vmatprep.subr.mxu0 0.0
        %1252 = vmatpush1.msra.mxu0 0.0
        %1253 = vmatprep.subr.mxu0 0.0
        %1254 = vmatpush1.msra.mxu0 0.0
        %1255 = vmatprep.subr.mxu0 0.0
        %1256 = vmatpush1.msra.mxu0 0.0
        %1257 = vmatprep.subr.mxu0 0.0
        %1258 = vmatpush1.msra.mxu0 0.0
        %1259 = vmatprep.subr.mxu0 0.0
        %1260 = vmatpush1.msra.mxu0 0.0
        %1261 = vmatprep.subr.mxu0 0.0
        %1262 = vmatpush1.msra.mxu0 0.0
        %1263 = vmatprep.subr.mxu0 0.0
        %1264 = vmatpush1.msra.mxu0 0.0
        %1265 = vmatprep.subr.mxu0 0.0
        %1266 = vmatpush1.msra.mxu0 0.0
        %1267 = vmatprep.subr.mxu0 0.0
        %1268 = vmatpush1.msra.mxu0 0.0
        %1269 = vmatprep.subr.mxu0 0.0
        %1270 = vmatpush1.msra.mxu0 0.0
        %1271 = vmatprep.subr.mxu0 0.0
        %1272 = vmatpush1.msra.mxu0 0.0
        %1273 = vmatprep.subr.mxu0 0.0
        %1274 = vmatpush1.msra.mxu0 0.0
        %1275 = vmatprep.mubr.f32.mxu0 0.0
        %1276 = vmatmul.mubr.f32.gmra.mrb[0].mxu0 %v1209
        %v1277 = vpop.f32.mrb[0].mxu0
        %v1278 = vadd.f32 0.0, %v1277
        %v1279 = vpop.f32.mrb[0].mxu0
        %1280 = vdwg.mxu0
        %v1281 = vrcp.pop %v1204
        %v1282 = vmul.f32 %v1278, %v1281
        %1283 = vst.msk [vmem:[%s383 + $0x18] sm:$0xff] %vm619, %v1282
        %p1284 = scmp.lt.s32.totalorder %s25, 1
        %s1285 = scalar_select %p1284, %s25, 1
        %s1286 = smul.addr %s1285, 4
        %s1287 = smul.addr %s1286, 8
        %s1288 = scalar_lea.vmem %s6, %s1287
        // Predicated region
        $region69: #{tpu_custom_call.1} parent=43 // pred_check
          %p1289 = pneg %p184
        $region70: #{tpu_custom_call.1} parent=43 // pred_check_branch
          %1291 = sbr.rel (%p1289) target = $region72
        $region71: #{tpu_custom_call.1} parent=43 // pred_region
          _
        $region72: #{tpu_custom_call.1} parent=43 // pred_fallthru
          _
      $region44: #{tpu_custom_call.1} parent=5 // pred_fallthru
        _
      %p1292 = scmp.le.s32.totalorder 2, %s20
      // Predicated region
      $region73: #{tpu_custom_call.1} parent=5 // pred_check
        %p1293 = pneg %p1292
      $region74: #{tpu_custom_call.1} parent=5 // pred_check_branch
        %1295 = sbr.rel (%p1293) target = $region76
      $region75: #{tpu_custom_call.1} parent=5 // pred_region
        %s1296 = ssub.s32 %s20, 2
        // Predicated region
        $region77: #{tpu_custom_call.1} parent=75 // pred_check
          %p1297 = pneg %p190
        $region78: #{tpu_custom_call.1} parent=75 // pred_check_branch
          %1299 = sbr.rel (%p1297) target = $region80
        $region79: #{tpu_custom_call.1} parent=75 // pred_region
          %p1300 = scmp.lt.s32.totalorder %s26, 1
          %s1301 = scalar_select %p1300, %s26, 1
          %s1302 = smul.addr %s1301, 4
          %s1303 = smul.addr %s1302, 8
          %s1304 = scalar_lea.vmem %s6, %s1303
        $region80: #{tpu_custom_call.1} parent=75 // pred_fallthru
          _
      $region76: #{tpu_custom_call.1} parent=5 // pred_fallthru
        _
    $region6: #{tpu_custom_call.1} parent=1 // loop_footer
      %s24 = sadd.s32 1, %s20
    $region7: #{tpu_custom_call.1} parent=1 // loop_footer_branch
      %19 = sbr.rel target = $region3
    $region8: #{tpu_custom_call.1} parent=1 // loop_exit
      _
    %1305 = vsyncpa [#allocation3], 1
    %s1306 = scalar_lea.sflag [#allocation3], 1
    %1307 = vsyncpa %s1306, 1
    %1308 = vsyncpa [#allocation5], 1
    %s1309 = scalar_lea.sflag [#allocation5], 1
    %1310 = vsyncpa %s1309, 1
    %1311 = vsyncpa [#allocation8], 1
    %1312 = vsyncpa [#allocation11], 1

</llo_original>
